<compile_context>
chip_gen: v7x
topology: tpu7x:2x2x1
jax: 0.10.0
libtpu: 0.0.40
codegen_flags: <defaults>
</compile_context>

<pallas_src>
import functools

import jax
import jax.numpy as jnp
from jax.experimental import pallas as pl
from jax.experimental.pallas import tpu as pltpu


def _airl_kernel(
    # packed data tile: rows = [states | next_states | actions | dones | log_pis],
    # batch on the lane axis.
    x_ref,
    # g-network params, stored (out_features, in_features); first layer split
    # into state / action parts so no in-kernel feature concat is needed.
    gW0s_ref, gW0a_ref, gb0_ref, gW1_ref, gb1_ref, gW2_ref, gb2_ref,
    # h-network params, same layout.
    hW0_ref, hb0_ref, hW1_ref, hb1_ref, hW2_ref, hb2_ref,
    # output tile: (1, batch_tile) — lane-dense.
    out_ref,
    *, gamma, s_dim, a_dim,
):
    f32 = jnp.float32
    tile = out_ref.shape[1]
    S, A = s_dim, a_dim

    # Static slices carve the packed VMEM tile (one HBM DMA) into its parts.
    s_t = x_ref[0:S, :]                              # (S, tile)
    ns_t = x_ref[S:2 * S, :]                         # (S, tile)
    a_t = x_ref[2 * S:2 * S + A, :]                  # (A, tile)
    d_t = x_ref[2 * S + A:2 * S + A + 1, :]          # (1, tile)
    lp_t = x_ref[2 * S + A + 1:2 * S + A + 2, :]     # (1, tile)

    def dot_t(w_ref, x):
        # W (out, in) @ x (in, n); operands in streaming dtype, f32 accumulate.
        w = w_ref[...]
        return jnp.dot(w, x.astype(w.dtype), preferred_element_type=f32)

    # ---- g([s, a]) : reward network (split first layer == block matmul) ----
    z0 = dot_t(gW0s_ref, s_t) + dot_t(gW0a_ref, a_t) + gb0_ref[...].astype(f32)
    z0 = jnp.maximum(z0, 0.0)
    z1 = jnp.maximum(dot_t(gW1_ref, z0) + gb1_ref[...].astype(f32), 0.0)
    rs = dot_t(gW2_ref, z1) + gb2_ref[...].astype(f32)              # (1, tile)

    # ---- h(x) : value network, batched over [states | next_states] ---------
    x2 = jnp.concatenate([s_t, ns_t], axis=1)                        # (S, 2*tile)
    y0 = jnp.maximum(dot_t(hW0_ref, x2) + hb0_ref[...].astype(f32), 0.0)
    y1 = jnp.maximum(dot_t(hW1_ref, y0) + hb1_ref[...].astype(f32), 0.0)
    vv = dot_t(hW2_ref, y1) + hb2_ref[...].astype(f32)               # (1, 2*tile)
    vs = vv[:, :tile]
    nvs = vv[:, tile:]

    # ---- f(...) - log_pis (f32 elementwise, lane-dense) ---------------------
    d = d_t.astype(f32)
    lp = lp_t.astype(f32)
    out = rs + gamma * (1.0 - d) * nvs - vs - lp                     # (1, tile)
    out_ref[...] = out.astype(out_ref.dtype)


def airl_discrim_forward(states, actions, dones, log_pis, next_states,
                         params, gamma, *, batch_tile=128,
                         compute_dtype=jnp.float32):
    B, S = states.shape
    A = actions.shape[1]
    assert batch_tile % 128 == 0, "keep the lane (batch) axis 128-aligned"

    # ---- pack all per-row inputs into one dense, feature-major array -------
    # rows: [states (S) | next_states (S) | actions (A) | dones (1) | log_pis (1)]
    packed = jnp.concatenate(
        [states, next_states, actions, dones, log_pis], axis=1)     # (B, F)
    F = 2 * S + A + 2
    packed_t = packed.T.astype(compute_dtype)                        # (F, B)

    # Pad the batch (lane) axis up to a multiple of batch_tile.
    n_tiles = -(-B // batch_tile)
    Bp = n_tiles * batch_tile
    if Bp != B:
        packed_t = jnp.pad(packed_t, ((0, 0), (0, Bp - B)))

    # ---- weights in (out_features, in_features) layout, biases (out, 1) -----
    t = lambda name: params[name].T.astype(compute_dtype)
    param_args = [t("gW0s"), t("gW0a"), t("gb0"), t("gW1"), t("gb1"),
                  t("gW2"), t("gb2"),
                  t("hW0"), t("hb0"), t("hW1"), t("hb1"), t("hW2"), t("hb2")]

    kernel = functools.partial(_airl_kernel, gamma=float(gamma),
                               s_dim=S, a_dim=A)

    # Data tile streams over the batch grid; params are resident (same block
    # index every step).
    data_spec = pl.BlockSpec((F, batch_tile), lambda i: (0, i))
    param_specs = [pl.BlockSpec(p.shape, lambda i: (0, 0)) for p in param_args]

    out2d = pl.pallas_call(
        kernel,
        out_shape=jax.ShapeDtypeStruct((1, Bp), jnp.float32),
        grid_spec=pltpu.PrefetchScalarGridSpec(
            num_scalar_prefetch=0,
            grid=(n_tiles,),
            in_specs=[data_spec] + param_specs,
            out_specs=pl.BlockSpec((1, batch_tile), lambda i: (0, i)),
        ),
        compiler_params=pltpu.CompilerParams(
            dimension_semantics=("parallel",)),
    )(packed_t, *param_args)

    return out2d[0, :B].reshape(B, 1)


def _init_params(key, state_dim, action_dim, hidden):
    """Deterministic synthetic parameter init (shapes match build_mlp)."""
    ks = jax.random.split(key, 12)
    scale = 0.1
    return {
        # g : Linear(S+A -> H) split into state / action parts,
        #     Linear(H -> H), Linear(H -> 1)
        "gW0s": scale * jax.random.normal(ks[0], (state_dim, hidden), jnp.float32),
        "gW0a": scale * jax.random.normal(ks[1], (action_dim, hidden), jnp.float32),
        "gb0": scale * jax.random.normal(ks[2], (1, hidden), jnp.float32),
        "gW1": scale * jax.random.normal(ks[3], (hidden, hidden), jnp.float32),
        "gb1": scale * jax.random.normal(ks[4], (1, hidden), jnp.float32),
        "gW2": scale * jax.random.normal(ks[5], (hidden, 1), jnp.float32),
        "gb2": scale * jax.random.normal(ks[6], (1, 1), jnp.float32),
        # h : Linear(S -> H), Linear(H -> H), Linear(H -> 1)
        "hW0": scale * jax.random.normal(ks[7], (state_dim, hidden), jnp.float32),
        "hb0": scale * jax.random.normal(ks[8], (1, hidden), jnp.float32),
        "hW1": scale * jax.random.normal(ks[9], (hidden, hidden), jnp.float32),
        "hb1": scale * jax.random.normal(ks[10], (1, hidden), jnp.float32),
        "hW2": scale * jax.random.normal(ks[11], (hidden, 1), jnp.float32),
        "hb2": jnp.zeros((1, 1), jnp.float32),
    }


def _reference_forward(states, actions, dones, log_pis, next_states, p, gamma):
    """Pure-JAX reference matching the PyTorch module semantics."""
    def mlp(x, W0, b0, W1, b1, W2, b2):
        y = jnp.maximum(x @ W0 + b0, 0.0)
        y = jnp.maximum(y @ W1 + b1, 0.0)
        return y @ W2 + b2

    sa = jnp.concatenate([states, actions], axis=-1)
    gW0 = jnp.concatenate([p["gW0s"], p["gW0a"]], axis=0)
    rs = mlp(sa, gW0, p["gb0"], p["gW1"], p["gb1"], p["gW2"], p["gb2"])
    vs = mlp(states, p["hW0"], p["hb0"], p["hW1"], p["hb1"], p["hW2"], p["hb2"])
    nvs = mlp(next_states, p["hW0"], p["hb0"], p["hW1"], p["hb1"], p["hW2"], p["hb2"])
    return rs + gamma * (1.0 - dones) * nvs - vs - log_pis


if __name__ == "__main__":
    B, S, A, H = 256, 16, 8, 32
    gamma = 0.99

    key = jax.random.PRNGKey(0)
    k_par, k_s, k_a, k_d, k_lp, k_ns = jax.random.split(key, 6)

    params = _init_params(k_par, S, A, H)

    states = jax.random.normal(k_s, (B, S), jnp.float32)
    actions = jax.random.normal(k_a, (B, A), jnp.float32)
    dones = (jax.random.uniform(k_d, (B, 1)) < 0.3).astype(jnp.float32)
    log_pis = jax.random.normal(k_lp, (B, 1), jnp.float32)
    next_states = jax.random.normal(k_ns, (B, S), jnp.float32)

    ref = _reference_forward(states, actions, dones, log_pis, next_states,
                             params, gamma)

    # f32 streaming (tight numerical check).
    out32 = airl_discrim_forward(states, actions, dones, log_pis, next_states,
                                 params, gamma, batch_tile=128,
                                 compute_dtype=jnp.float32)
    out32 = jax.block_until_ready(out32)
    assert out32.shape == (B, 1)
    assert jnp.allclose(out32, ref, atol=5e-4, rtol=5e-4), (out32, ref)

    # bf16 streaming (halved HBM traffic; f32 MXU accumulate + f32 combine).
    out16 = airl_discrim_forward(states, actions, dones, log_pis, next_states,
                                 params, gamma, batch_tile=128,
                                 compute_dtype=jnp.bfloat16)
    out16 = jax.block_until_ready(out16)
    assert out16.shape == (B, 1)
    assert jnp.allclose(out16, ref, atol=1e-1, rtol=1e-1), (out16, ref)

    print("KERNEL_OK")
</pallas_src>

<mosaic_0001>
module attributes {stable_mosaic.version = 11 : i64} {
  func.func @_airl_kernel(%arg0: i32, %arg1: memref<42x128xf32, #tpu.memory_space<vmem>>, %arg2: memref<32x16xf32, #tpu.memory_space<vmem>>, %arg3: memref<32x8xf32, #tpu.memory_space<vmem>>, %arg4: memref<32x1xf32, #tpu.memory_space<vmem>>, %arg5: memref<32x32xf32, #tpu.memory_space<vmem>>, %arg6: memref<32x1xf32, #tpu.memory_space<vmem>>, %arg7: memref<1x32xf32, #tpu.memory_space<vmem>>, %arg8: memref<1x1xf32, #tpu.memory_space<vmem>>, %arg9: memref<32x16xf32, #tpu.memory_space<vmem>>, %arg10: memref<32x1xf32, #tpu.memory_space<vmem>>, %arg11: memref<32x32xf32, #tpu.memory_space<vmem>>, %arg12: memref<32x1xf32, #tpu.memory_space<vmem>>, %arg13: memref<1x32xf32, #tpu.memory_space<vmem>>, %arg14: memref<1x1xf32, #tpu.memory_space<vmem>>, %arg15: memref<1x128xf32, #tpu.memory_space<vmem>>) attributes {dimension_semantics = [#tpu.dimension_semantics<parallel>], iteration_bounds = array<i64: 2>, scalar_prefetch = 0 : i64, scratch_operands = 0 : i64, tpu.core_type = #tpu.core_type<tc>, window_params = [{transform_indices = @transform_0, window_bounds = array<i64: 42, 128>}, {pipeline_mode = #tpu.pipeline_mode<synchronous>, transform_indices = @transform_1, window_bounds = array<i64: 32, 16>}, {pipeline_mode = #tpu.pipeline_mode<synchronous>, transform_indices = @transform_2, window_bounds = array<i64: 32, 8>}, {pipeline_mode = #tpu.pipeline_mode<synchronous>, transform_indices = @transform_3, window_bounds = array<i64: 32, 1>}, {pipeline_mode = #tpu.pipeline_mode<synchronous>, transform_indices = @transform_4, window_bounds = array<i64: 32, 32>}, {pipeline_mode = #tpu.pipeline_mode<synchronous>, transform_indices = @transform_5, window_bounds = array<i64: 32, 1>}, {pipeline_mode = #tpu.pipeline_mode<synchronous>, transform_indices = @transform_6, window_bounds = array<i64: 1, 32>}, {pipeline_mode = #tpu.pipeline_mode<synchronous>, transform_indices = @transform_7, window_bounds = array<i64: 1, 1>}, {pipeline_mode = #tpu.pipeline_mode<synchronous>, transform_indices = @transform_8, window_bounds = array<i64: 32, 16>}, {pipeline_mode = #tpu.pipeline_mode<synchronous>, transform_indices = @transform_9, window_bounds = array<i64: 32, 1>}, {pipeline_mode = #tpu.pipeline_mode<synchronous>, transform_indices = @transform_10, window_bounds = array<i64: 32, 32>}, {pipeline_mode = #tpu.pipeline_mode<synchronous>, transform_indices = @transform_11, window_bounds = array<i64: 32, 1>}, {pipeline_mode = #tpu.pipeline_mode<synchronous>, transform_indices = @transform_12, window_bounds = array<i64: 1, 32>}, {pipeline_mode = #tpu.pipeline_mode<synchronous>, transform_indices = @transform_13, window_bounds = array<i64: 1, 1>}, {transform_indices = @transform_14, window_bounds = array<i64: 1, 128>}]} {
    %c0 = arith.constant 0 : index
    %c0_0 = arith.constant 0 : index
    %0 = vector.load %arg1[%c0, %c0_0] : memref<42x128xf32, #tpu.memory_space<vmem>>, vector<16x128xf32>
    %c16 = arith.constant 16 : index
    %c0_1 = arith.constant 0 : index
    %1 = vector.load %arg1[%c16, %c0_1] : memref<42x128xf32, #tpu.memory_space<vmem>>, vector<16x128xf32>
    %c32 = arith.constant 32 : index
    %c0_2 = arith.constant 0 : index
    %2 = vector.load %arg1[%c32, %c0_2] : memref<42x128xf32, #tpu.memory_space<vmem>>, vector<8x128xf32>
    %c40 = arith.constant 40 : index
    %c0_3 = arith.constant 0 : index
    %3 = vector.load %arg1[%c40, %c0_3] : memref<42x128xf32, #tpu.memory_space<vmem>>, vector<1x128xf32>
    %c41 = arith.constant 41 : index
    %c0_4 = arith.constant 0 : index
    %4 = vector.load %arg1[%c41, %c0_4] : memref<42x128xf32, #tpu.memory_space<vmem>>, vector<1x128xf32>
    %c0_5 = arith.constant 0 : index
    %c0_6 = arith.constant 0 : index
    %5 = vector.load %arg2[%c0_5, %c0_6] : memref<32x16xf32, #tpu.memory_space<vmem>>, vector<32x16xf32>
    %cst = arith.constant dense<0.000000e+00> : vector<32x128xf32>
    %6 = tpu.matmul %5, %0, %cst {dimension_numbers = #tpu.dot_dimension_numbers<[1], [0], [0], [1], [0, 0, 1, 1], [], []>} : vector<32x16xf32>, vector<16x128xf32>, vector<32x128xf32> -> vector<32x128xf32>
    %c0_7 = arith.constant 0 : index
    %c0_8 = arith.constant 0 : index
    %7 = vector.load %arg3[%c0_7, %c0_8] : memref<32x8xf32, #tpu.memory_space<vmem>>, vector<32x8xf32>
    %cst_9 = arith.constant dense<0.000000e+00> : vector<32x128xf32>
    %8 = tpu.matmul %7, %2, %cst_9 {dimension_numbers = #tpu.dot_dimension_numbers<[1], [0], [0], [1], [0, 0, 1, 1], [], []>} : vector<32x8xf32>, vector<8x128xf32>, vector<32x128xf32> -> vector<32x128xf32>
    %9 = arith.addf %6, %8 : vector<32x128xf32>
    %c0_10 = arith.constant 0 : index
    %c0_11 = arith.constant 0 : index
    %10 = vector.load %arg4[%c0_10, %c0_11] : memref<32x1xf32, #tpu.memory_space<vmem>>, vector<32x1xf32>
    %11 = vector.broadcast %10 : vector<32x1xf32> to vector<32x128xf32>
    %12 = arith.addf %9, %11 : vector<32x128xf32>
    %cst_12 = arith.constant 0.000000e+00 : f32
    %13 = vector.broadcast %cst_12 : f32 to vector<32x128xf32>
    %14 = arith.maximumf %12, %13 : vector<32x128xf32>
    %c0_13 = arith.constant 0 : index
    %c0_14 = arith.constant 0 : index
    %15 = vector.load %arg5[%c0_13, %c0_14] : memref<32x32xf32, #tpu.memory_space<vmem>>, vector<32x32xf32>
    %cst_15 = arith.constant dense<0.000000e+00> : vector<32x128xf32>
    %16 = tpu.matmul %15, %14, %cst_15 {dimension_numbers = #tpu.dot_dimension_numbers<[1], [0], [0], [1], [0, 0, 1, 1], [], []>} : vector<32x32xf32>, vector<32x128xf32>, vector<32x128xf32> -> vector<32x128xf32>
    %c0_16 = arith.constant 0 : index
    %c0_17 = arith.constant 0 : index
    %17 = vector.load %arg6[%c0_16, %c0_17] : memref<32x1xf32, #tpu.memory_space<vmem>>, vector<32x1xf32>
    %18 = vector.broadcast %17 : vector<32x1xf32> to vector<32x128xf32>
    %19 = arith.addf %16, %18 : vector<32x128xf32>
    %cst_18 = arith.constant 0.000000e+00 : f32
    %20 = vector.broadcast %cst_18 : f32 to vector<32x128xf32>
    %21 = arith.maximumf %19, %20 : vector<32x128xf32>
    %c0_19 = arith.constant 0 : index
    %c0_20 = arith.constant 0 : index
    %22 = vector.load %arg7[%c0_19, %c0_20] : memref<1x32xf32, #tpu.memory_space<vmem>>, vector<1x32xf32>
    %cst_21 = arith.constant dense<0.000000e+00> : vector<1x128xf32>
    %23 = tpu.matmul %22, %21, %cst_21 {dimension_numbers = #tpu.dot_dimension_numbers<[1], [0], [0], [1], [0, 0, 1, 1], [], []>} : vector<1x32xf32>, vector<32x128xf32>, vector<1x128xf32> -> vector<1x128xf32>
    %c0_22 = arith.constant 0 : index
    %c0_23 = arith.constant 0 : index
    %24 = vector.load %arg8[%c0_22, %c0_23] : memref<1x1xf32, #tpu.memory_space<vmem>>, vector<1x1xf32>
    %25 = vector.broadcast %24 : vector<1x1xf32> to vector<1x128xf32>
    %26 = arith.addf %23, %25 : vector<1x128xf32>
    %27 = tpu.concatenate %0, %1 in 1 : vector<16x128xf32>, vector<16x128xf32> -> vector<16x256xf32>
    %c0_24 = arith.constant 0 : index
    %c0_25 = arith.constant 0 : index
    %28 = vector.load %arg9[%c0_24, %c0_25] : memref<32x16xf32, #tpu.memory_space<vmem>>, vector<32x16xf32>
    %cst_26 = arith.constant dense<0.000000e+00> : vector<32x256xf32>
    %29 = tpu.matmul %28, %27, %cst_26 {dimension_numbers = #tpu.dot_dimension_numbers<[1], [0], [0], [1], [0, 0, 1, 1], [], []>} : vector<32x16xf32>, vector<16x256xf32>, vector<32x256xf32> -> vector<32x256xf32>
    %c0_27 = arith.constant 0 : index
    %c0_28 = arith.constant 0 : index
    %30 = vector.load %arg10[%c0_27, %c0_28] : memref<32x1xf32, #tpu.memory_space<vmem>>, vector<32x1xf32>
    %31 = vector.broadcast %30 : vector<32x1xf32> to vector<32x256xf32>
    %32 = arith.addf %29, %31 : vector<32x256xf32>
    %cst_29 = arith.constant 0.000000e+00 : f32
    %33 = vector.broadcast %cst_29 : f32 to vector<32x256xf32>
    %34 = arith.maximumf %32, %33 : vector<32x256xf32>
    %c0_30 = arith.constant 0 : index
    %c0_31 = arith.constant 0 : index
    %35 = vector.load %arg11[%c0_30, %c0_31] : memref<32x32xf32, #tpu.memory_space<vmem>>, vector<32x32xf32>
    %cst_32 = arith.constant dense<0.000000e+00> : vector<32x256xf32>
    %36 = tpu.matmul %35, %34, %cst_32 {dimension_numbers = #tpu.dot_dimension_numbers<[1], [0], [0], [1], [0, 0, 1, 1], [], []>} : vector<32x32xf32>, vector<32x256xf32>, vector<32x256xf32> -> vector<32x256xf32>
    %c0_33 = arith.constant 0 : index
    %c0_34 = arith.constant 0 : index
    %37 = vector.load %arg12[%c0_33, %c0_34] : memref<32x1xf32, #tpu.memory_space<vmem>>, vector<32x1xf32>
    %38 = vector.broadcast %37 : vector<32x1xf32> to vector<32x256xf32>
    %39 = arith.addf %36, %38 : vector<32x256xf32>
    %cst_35 = arith.constant 0.000000e+00 : f32
    %40 = vector.broadcast %cst_35 : f32 to vector<32x256xf32>
    %41 = arith.maximumf %39, %40 : vector<32x256xf32>
    %c0_36 = arith.constant 0 : index
    %c0_37 = arith.constant 0 : index
    %42 = vector.load %arg13[%c0_36, %c0_37] : memref<1x32xf32, #tpu.memory_space<vmem>>, vector<1x32xf32>
    %cst_38 = arith.constant dense<0.000000e+00> : vector<1x256xf32>
    %43 = tpu.matmul %42, %41, %cst_38 {dimension_numbers = #tpu.dot_dimension_numbers<[1], [0], [0], [1], [0, 0, 1, 1], [], []>} : vector<1x32xf32>, vector<32x256xf32>, vector<1x256xf32> -> vector<1x256xf32>
    %c0_39 = arith.constant 0 : index
    %c0_40 = arith.constant 0 : index
    %44 = vector.load %arg14[%c0_39, %c0_40] : memref<1x1xf32, #tpu.memory_space<vmem>>, vector<1x1xf32>
    %45 = vector.broadcast %44 : vector<1x1xf32> to vector<1x256xf32>
    %46 = arith.addf %43, %45 : vector<1x256xf32>
    %47 = vector.extract_strided_slice %46 {offsets = [0, 0], sizes = [1, 128], strides = [1, 1]} : vector<1x256xf32> to vector<1x128xf32>
    %48 = vector.extract_strided_slice %46 {offsets = [0, 128], sizes = [1, 128], strides = [1, 1]} : vector<1x256xf32> to vector<1x128xf32>
    %cst_41 = arith.constant 1.000000e+00 : f32
    %49 = vector.broadcast %cst_41 : f32 to vector<1x128xf32>
    %50 = arith.subf %49, %3 : vector<1x128xf32>
    %cst_42 = arith.constant 9.900000e-01 : f32
    %51 = vector.broadcast %cst_42 : f32 to vector<1x128xf32>
    %52 = arith.mulf %51, %50 : vector<1x128xf32>
    %53 = arith.mulf %52, %48 : vector<1x128xf32>
    %54 = arith.addf %26, %53 : vector<1x128xf32>
    %55 = arith.subf %54, %47 : vector<1x128xf32>
    %56 = arith.subf %55, %4 : vector<1x128xf32>
    %c0_43 = arith.constant 0 : index
    %c0_44 = arith.constant 0 : index
    %57 = vector.load %arg15[%c0_43, %c0_44] : memref<1x128xf32, #tpu.memory_space<vmem>>, vector<1x128xf32>
    tpu.vector_store %arg15[%c0_43, %c0_44], %56 {strides = array<i32>} : memref<1x128xf32, #tpu.memory_space<vmem>>, vector<1x128xf32>,
    return
  }
  func.func @transform_0(%arg0: i32) -> (i32, i32) {
    %c0_i32 = arith.constant 0 : i32
    %c0_i32_0 = arith.constant 0 : i32
    return %c0_i32, %arg0 : i32, i32
  }
  func.func @transform_1(%arg0: i32) -> (i32, i32) {
    %c0_i32 = arith.constant 0 : i32
    %c0_i32_0 = arith.constant 0 : i32
    %c0_i32_1 = arith.constant 0 : i32
    return %c0_i32, %c0_i32_0 : i32, i32
  }
  func.func @transform_2(%arg0: i32) -> (i32, i32) {
    %c0_i32 = arith.constant 0 : i32
    %c0_i32_0 = arith.constant 0 : i32
    %c0_i32_1 = arith.constant 0 : i32
    return %c0_i32, %c0_i32_0 : i32, i32
  }
  func.func @transform_3(%arg0: i32) -> (i32, i32) {
    %c0_i32 = arith.constant 0 : i32
    %c0_i32_0 = arith.constant 0 : i32
    %c0_i32_1 = arith.constant 0 : i32
    return %c0_i32, %c0_i32_0 : i32, i32
  }
  func.func @transform_4(%arg0: i32) -> (i32, i32) {
    %c0_i32 = arith.constant 0 : i32
    %c0_i32_0 = arith.constant 0 : i32
    %c0_i32_1 = arith.constant 0 : i32
    return %c0_i32, %c0_i32_0 : i32, i32
  }
  func.func @transform_5(%arg0: i32) -> (i32, i32) {
    %c0_i32 = arith.constant 0 : i32
    %c0_i32_0 = arith.constant 0 : i32
    %c0_i32_1 = arith.constant 0 : i32
    return %c0_i32, %c0_i32_0 : i32, i32
  }
  func.func @transform_6(%arg0: i32) -> (i32, i32) {
    %c0_i32 = arith.constant 0 : i32
    %c0_i32_0 = arith.constant 0 : i32
    %c0_i32_1 = arith.constant 0 : i32
    return %c0_i32, %c0_i32_0 : i32, i32
  }
  func.func @transform_7(%arg0: i32) -> (i32, i32) {
    %c0_i32 = arith.constant 0 : i32
    %c0_i32_0 = arith.constant 0 : i32
    %c0_i32_1 = arith.constant 0 : i32
    return %c0_i32, %c0_i32_0 : i32, i32
  }
  func.func @transform_8(%arg0: i32) -> (i32, i32) {
    %c0_i32 = arith.constant 0 : i32
    %c0_i32_0 = arith.constant 0 : i32
    %c0_i32_1 = arith.constant 0 : i32
    return %c0_i32, %c0_i32_0 : i32, i32
  }
  func.func @transform_9(%arg0: i32) -> (i32, i32) {
    %c0_i32 = arith.constant 0 : i32
    %c0_i32_0 = arith.constant 0 : i32
    %c0_i32_1 = arith.constant 0 : i32
    return %c0_i32, %c0_i32_0 : i32, i32
  }
  func.func @transform_10(%arg0: i32) -> (i32, i32) {
    %c0_i32 = arith.constant 0 : i32
    %c0_i32_0 = arith.constant 0 : i32
    %c0_i32_1 = arith.constant 0 : i32
    return %c0_i32, %c0_i32_0 : i32, i32
  }
  func.func @transform_11(%arg0: i32) -> (i32, i32) {
    %c0_i32 = arith.constant 0 : i32
    %c0_i32_0 = arith.constant 0 : i32
    %c0_i32_1 = arith.constant 0 : i32
    return %c0_i32, %c0_i32_0 : i32, i32
  }
  func.func @transform_12(%arg0: i32) -> (i32, i32) {
    %c0_i32 = arith.constant 0 : i32
    %c0_i32_0 = arith.constant 0 : i32
    %c0_i32_1 = arith.constant 0 : i32
    return %c0_i32, %c0_i32_0 : i32, i32
  }
  func.func @transform_13(%arg0: i32) -> (i32, i32) {
    %c0_i32 = arith.constant 0 : i32
    %c0_i32_0 = arith.constant 0 : i32
    %c0_i32_1 = arith.constant 0 : i32
    return %c0_i32, %c0_i32_0 : i32, i32
  }
  func.func @transform_14(%arg0: i32) -> (i32, i32) {
    %c0_i32 = arith.constant 0 : i32
    %c0_i32_0 = arith.constant 0 : i32
    return %c0_i32, %arg0 : i32, i32
  }
}

</mosaic_0001>

<llo_original>
// kernel: tpu_custom_call.1
$region0: #{tpu_custom_call.1}
  #allocation0 [shape = 'u32[]', space=smem, size = 0x4, offset = 0x4, fixed_abs, tag = 'smem constant byte address 0x4 - core index']
  #allocation1 [shape = 'u32[144,128]{1,0:T(1,128)}', space=vmem, size = 0x12000, scoped, tag = 'internal scratch']
  #allocation2 [shape = 'f32[1,1]{1,0:T(1,128)S(1)}', space=vmem, size = 0x200, scoped, tag = 'scoped memory for tpu_custom_call.1']
  #allocation3 [shape = 'f32[1,1]{1,0:T(1,128)S(1)}', space=vmem, size = 0x200, scoped, tag = 'scoped memory for tpu_custom_call.1']
  %s0 = inlined_call_operand.vmem [shape: f32[42,256], index: 0, kind: input, shape index: {}]
  %s1 = inlined_call_operand.vmem [shape: f32[32,16], index: 1, kind: input, shape index: {}]
  %s2 = inlined_call_operand.vmem [shape: f32[32,8], index: 2, kind: input, shape index: {}]
  %s3 = inlined_call_operand.vmem [shape: f32[32,1], index: 3, kind: input, shape index: {}]
  %s4 = inlined_call_operand.vmem [shape: f32[32,32], index: 4, kind: input, shape index: {}]
  %s5 = inlined_call_operand.vmem [shape: f32[32,1], index: 5, kind: input, shape index: {}]
  %s6 = inlined_call_operand.vmem [shape: f32[1,32], index: 6, kind: input, shape index: {}]
  %s7 = inlined_call_operand.<no memory space> [shape: f32[1,1], index: 7, kind: input, shape index: {}]
  %s8 = inlined_call_operand.vmem [shape: f32[32,16], index: 8, kind: input, shape index: {}]
  %s9 = inlined_call_operand.vmem [shape: f32[32,1], index: 9, kind: input, shape index: {}]
  %s10 = inlined_call_operand.vmem [shape: f32[32,32], index: 10, kind: input, shape index: {}]
  %s11 = inlined_call_operand.vmem [shape: f32[32,1], index: 11, kind: input, shape index: {}]
  %s12 = inlined_call_operand.vmem [shape: f32[1,32], index: 12, kind: input, shape index: {}]
  %s13 = inlined_call_operand.<no memory space> [shape: f32[1,1], index: 13, kind: input, shape index: {}]
  %s14 = inlined_call_operand.hbm [shape: f32[1,256], index: 14, kind: output, shape index: {}]
  %s15 = sld [smem:[#allocation0]]
  $region127: #{tpu_custom_call.1} parent=0
    _
  %s17 = ssub.s32 1, %s15
  %s18 = scalar_select 0, %s17, %s15
  %v19 = vstv %s7
  %20 = vst [vmem:[#allocation2] sm:$0x1] %v19
  %v21 = vstv %s13
  %22 = vst [vmem:[#allocation3] sm:$0x1] %v21
  $region1: #{tpu_custom_call.1} parent=0
    #allocation4 [shape = 'u8[49152]{0}', space=vmem, size = 0xc000, scoped, tag = 'input window, operand 0']
    #allocation5 [shape = 'u8[1024]{0}', space=vmem, size = 0x400, scoped, tag = 'output window, operand 0']
    #allocation6 [shape = 's32[2]{0}', space=sflag, size = 0x8, scoped, tag = 'scoped memory for tpu_custom_call.1']
    %23 = vsyncpa [#allocation6], 0
    %s24 = scalar_lea.sflag [#allocation6], 1
    %25 = vsyncpa %s24, 0
    loop: start=0, step=1, limit=4
    $region2: #{tpu_custom_call.1} parent=1 // loop_pre_header
      _
    $region3: #{tpu_custom_call.1} parent=1 // loop_header
      %s27 = sphi 0, %s31
      %p28 = scmp.ge.s32.totalorder %s27, 4
      %s37 = sphi 0, %s39
      %s40 = sphi 0, %s37
      %s41 = sphi 0, %s40
      %s57 = sphi 0, %s41
      %s61 = sphi 0, %s61
      %s63 = sphi 0, %s61
      %s64 = sphi 0, %s63
      %s78 = sphi 0, %s64
      %s82 = sphi 0, %s82
      %s84 = sphi 0, %s82
      %s85 = sphi 0, %s84
      %s99 = sphi 0, %s85
      %s103 = sphi 0, %s103
      %s105 = sphi 0, %s103
      %s106 = sphi 0, %s105
      %s120 = sphi 0, %s106
      %s124 = sphi 0, %s124
      %s126 = sphi 0, %s124
      %s127 = sphi 0, %s126
      %s141 = sphi 0, %s127
      %s145 = sphi 0, %s145
      %s147 = sphi 0, %s145
      %s148 = sphi 0, %s147
      %s162 = sphi 0, %s148
      %s166 = sphi 0, %s166
      %s168 = sphi 0, %s166
      %s169 = sphi 0, %s168
      %s183 = sphi 0, %s169
      %s187 = sphi 0, %s187
      %s189 = sphi 0, %s187
      %s190 = sphi 0, %s189
      %s204 = sphi 0, %s190
      %s208 = sphi 0, %s208
      %s210 = sphi 0, %s208
      %s211 = sphi 0, %s210
      %s225 = sphi 0, %s211
      %s229 = sphi 0, %s229
      %s231 = sphi 0, %s229
      %s232 = sphi 0, %s231
      %s246 = sphi 0, %s232
      %s250 = sphi 0, %s250
      %s252 = sphi 0, %s250
      %s253 = sphi 0, %s252
      %s267 = sphi 0, %s253
      %s271 = sphi 0, %s271
      %s273 = sphi 0, %s271
      %s274 = sphi 0, %s273
      %s288 = sphi 0, %s274
      %s292 = sphi 0, %s292
      %s294 = sphi 0, %s292
      %s295 = sphi 0, %s294
      %s309 = sphi 0, %s295
      %s313 = sphi 0, %s313
      %s315 = sphi 0, %s313
      %s316 = sphi 0, %s315
      %s330 = sphi 0, %s316
      %s336 = sphi 0, %s338
      %s339 = sphi 0, %s336
      %s340 = sphi 0, %s339
      %s356 = sphi 0, %s340
    $region4: #{tpu_custom_call.1} parent=1 // loop_header_branch
      %30 = sbr.rel (%p28) target = $region8
    $region5: #{tpu_custom_call.1} parent=1 // loop_body
      %s32 = ssub.s32 %s27, 1
      %s33 = ssub.s32 %s27, 2
      %s34 = sadd.s32 %s27, 1
      %s35 = ssub.s32 %s27, %s34
      %p36 = scmp.eq.s32.totalorder %s35, 0
      %s38 = sadd.s32 %s37, 1
      %s39 = scalar_select %p36, %s37, %s38
      %p42 = pneg %p36
      %p43 = scmp.eq.s32.totalorder %s27, 1
      %p44 = por %p42, %p43
      %p45 = scmp.ne.s32.totalorder %s37, %s40
      %p46 = scmp.eq.s32.totalorder %s27, 0
      %p47 = por %p45, %p46
      %p48 = scmp.ne.s32.totalorder %s37, %s40
      %p49 = scmp.eq.s32.totalorder %s32, 1
      %p50 = por %p48, %p49
      %p51 = scmp.ne.s32.totalorder %s40, %s41
      %p52 = scmp.eq.s32.totalorder %s32, 0
      %p53 = por %p51, %p52
      %p54 = scmp.ne.s32.totalorder %s40, %s41
      %p55 = scmp.eq.s32.totalorder %s33, 1
      %p56 = por %p54, %p55
      %p58 = scmp.ne.s32.totalorder %s41, %s57
      %p59 = scmp.eq.s32.totalorder %s33, 0
      %p60 = por %p58, %p59
      %s62 = sadd.s32 %s61, 1
      %p65 = scmp.eq.s32.totalorder %s27, 1
      %p66 = scmp.ne.s32.totalorder %s61, %s63
      %p67 = scmp.eq.s32.totalorder %s27, 0
      %p68 = por %p66, %p67
      %p69 = scmp.ne.s32.totalorder %s61, %s63
      %p70 = scmp.eq.s32.totalorder %s32, 1
      %p71 = por %p69, %p70
      %p72 = scmp.ne.s32.totalorder %s63, %s64
      %p73 = scmp.eq.s32.totalorder %s32, 0
      %p74 = por %p72, %p73
      %p75 = scmp.ne.s32.totalorder %s63, %s64
      %p76 = scmp.eq.s32.totalorder %s33, 1
      %p77 = por %p75, %p76
      %p79 = scmp.ne.s32.totalorder %s64, %s78
      %p80 = scmp.eq.s32.totalorder %s33, 0
      %p81 = por %p79, %p80
      %s83 = sadd.s32 %s82, 1
      %p86 = scmp.eq.s32.totalorder %s27, 1
      %p87 = scmp.ne.s32.totalorder %s82, %s84
      %p88 = scmp.eq.s32.totalorder %s27, 0
      %p89 = por %p87, %p88
      %p90 = scmp.ne.s32.totalorder %s82, %s84
      %p91 = scmp.eq.s32.totalorder %s32, 1
      %p92 = por %p90, %p91
      %p93 = scmp.ne.s32.totalorder %s84, %s85
      %p94 = scmp.eq.s32.totalorder %s32, 0
      %p95 = por %p93, %p94
      %p96 = scmp.ne.s32.totalorder %s84, %s85
      %p97 = scmp.eq.s32.totalorder %s33, 1
      %p98 = por %p96, %p97
      %p100 = scmp.ne.s32.totalorder %s85, %s99
      %p101 = scmp.eq.s32.totalorder %s33, 0
      %p102 = por %p100, %p101
      %s104 = sadd.s32 %s103, 1
      %p107 = scmp.eq.s32.totalorder %s27, 1
      %p108 = scmp.ne.s32.totalorder %s103, %s105
      %p109 = scmp.eq.s32.totalorder %s27, 0
      %p110 = por %p108, %p109
      %p111 = scmp.ne.s32.totalorder %s103, %s105
      %p112 = scmp.eq.s32.totalorder %s32, 1
      %p113 = por %p111, %p112
      %p114 = scmp.ne.s32.totalorder %s105, %s106
      %p115 = scmp.eq.s32.totalorder %s32, 0
      %p116 = por %p114, %p115
      %p117 = scmp.ne.s32.totalorder %s105, %s106
      %p118 = scmp.eq.s32.totalorder %s33, 1
      %p119 = por %p117, %p118
      %p121 = scmp.ne.s32.totalorder %s106, %s120
      %p122 = scmp.eq.s32.totalorder %s33, 0
      %p123 = por %p121, %p122
      %s125 = sadd.s32 %s124, 1
      %p128 = scmp.eq.s32.totalorder %s27, 1
      %p129 = scmp.ne.s32.totalorder %s124, %s126
      %p130 = scmp.eq.s32.totalorder %s27, 0
      %p131 = por %p129, %p130
      %p132 = scmp.ne.s32.totalorder %s124, %s126
      %p133 = scmp.eq.s32.totalorder %s32, 1
      %p134 = por %p132, %p133
      %p135 = scmp.ne.s32.totalorder %s126, %s127
      %p136 = scmp.eq.s32.totalorder %s32, 0
      %p137 = por %p135, %p136
      %p138 = scmp.ne.s32.totalorder %s126, %s127
      %p139 = scmp.eq.s32.totalorder %s33, 1
      %p140 = por %p138, %p139
      %p142 = scmp.ne.s32.totalorder %s127, %s141
      %p143 = scmp.eq.s32.totalorder %s33, 0
      %p144 = por %p142, %p143
      %s146 = sadd.s32 %s145, 1
      %p149 = scmp.eq.s32.totalorder %s27, 1
      %p150 = scmp.ne.s32.totalorder %s145, %s147
      %p151 = scmp.eq.s32.totalorder %s27, 0
      %p152 = por %p150, %p151
      %p153 = scmp.ne.s32.totalorder %s145, %s147
      %p154 = scmp.eq.s32.totalorder %s32, 1
      %p155 = por %p153, %p154
      %p156 = scmp.ne.s32.totalorder %s147, %s148
      %p157 = scmp.eq.s32.totalorder %s32, 0
      %p158 = por %p156, %p157
      %p159 = scmp.ne.s32.totalorder %s147, %s148
      %p160 = scmp.eq.s32.totalorder %s33, 1
      %p161 = por %p159, %p160
      %p163 = scmp.ne.s32.totalorder %s148, %s162
      %p164 = scmp.eq.s32.totalorder %s33, 0
      %p165 = por %p163, %p164
      %s167 = sadd.s32 %s166, 1
      %p170 = scmp.eq.s32.totalorder %s27, 1
      %p171 = scmp.ne.s32.totalorder %s166, %s168
      %p172 = scmp.eq.s32.totalorder %s27, 0
      %p173 = por %p171, %p172
      %p174 = scmp.ne.s32.totalorder %s166, %s168
      %p175 = scmp.eq.s32.totalorder %s32, 1
      %p176 = por %p174, %p175
      %p177 = scmp.ne.s32.totalorder %s168, %s169
      %p178 = scmp.eq.s32.totalorder %s32, 0
      %p179 = por %p177, %p178
      %p180 = scmp.ne.s32.totalorder %s168, %s169
      %p181 = scmp.eq.s32.totalorder %s33, 1
      %p182 = por %p180, %p181
      %p184 = scmp.ne.s32.totalorder %s169, %s183
      %p185 = scmp.eq.s32.totalorder %s33, 0
      %p186 = por %p184, %p185
      %s188 = sadd.s32 %s187, 1
      %p191 = scmp.eq.s32.totalorder %s27, 1
      %p192 = scmp.ne.s32.totalorder %s187, %s189
      %p193 = scmp.eq.s32.totalorder %s27, 0
      %p194 = por %p192, %p193
      %p195 = scmp.ne.s32.totalorder %s187, %s189
      %p196 = scmp.eq.s32.totalorder %s32, 1
      %p197 = por %p195, %p196
      %p198 = scmp.ne.s32.totalorder %s189, %s190
      %p199 = scmp.eq.s32.totalorder %s32, 0
      %p200 = por %p198, %p199
      %p201 = scmp.ne.s32.totalorder %s189, %s190
      %p202 = scmp.eq.s32.totalorder %s33, 1
      %p203 = por %p201, %p202
      %p205 = scmp.ne.s32.totalorder %s190, %s204
      %p206 = scmp.eq.s32.totalorder %s33, 0
      %p207 = por %p205, %p206
      %s209 = sadd.s32 %s208, 1
      %p212 = scmp.eq.s32.totalorder %s27, 1
      %p213 = scmp.ne.s32.totalorder %s208, %s210
      %p214 = scmp.eq.s32.totalorder %s27, 0
      %p215 = por %p213, %p214
      %p216 = scmp.ne.s32.totalorder %s208, %s210
      %p217 = scmp.eq.s32.totalorder %s32, 1
      %p218 = por %p216, %p217
      %p219 = scmp.ne.s32.totalorder %s210, %s211
      %p220 = scmp.eq.s32.totalorder %s32, 0
      %p221 = por %p219, %p220
      %p222 = scmp.ne.s32.totalorder %s210, %s211
      %p223 = scmp.eq.s32.totalorder %s33, 1
      %p224 = por %p222, %p223
      %p226 = scmp.ne.s32.totalorder %s211, %s225
      %p227 = scmp.eq.s32.totalorder %s33, 0
      %p228 = por %p226, %p227
      %s230 = sadd.s32 %s229, 1
      %p233 = scmp.eq.s32.totalorder %s27, 1
      %p234 = scmp.ne.s32.totalorder %s229, %s231
      %p235 = scmp.eq.s32.totalorder %s27, 0
      %p236 = por %p234, %p235
      %p237 = scmp.ne.s32.totalorder %s229, %s231
      %p238 = scmp.eq.s32.totalorder %s32, 1
      %p239 = por %p237, %p238
      %p240 = scmp.ne.s32.totalorder %s231, %s232
      %p241 = scmp.eq.s32.totalorder %s32, 0
      %p242 = por %p240, %p241
      %p243 = scmp.ne.s32.totalorder %s231, %s232
      %p244 = scmp.eq.s32.totalorder %s33, 1
      %p245 = por %p243, %p244
      %p247 = scmp.ne.s32.totalorder %s232, %s246
      %p248 = scmp.eq.s32.totalorder %s33, 0
      %p249 = por %p247, %p248
      %s251 = sadd.s32 %s250, 1
      %p254 = scmp.eq.s32.totalorder %s27, 1
      %p255 = scmp.ne.s32.totalorder %s250, %s252
      %p256 = scmp.eq.s32.totalorder %s27, 0
      %p257 = por %p255, %p256
      %p258 = scmp.ne.s32.totalorder %s250, %s252
      %p259 = scmp.eq.s32.totalorder %s32, 1
      %p260 = por %p258, %p259
      %p261 = scmp.ne.s32.totalorder %s252, %s253
      %p262 = scmp.eq.s32.totalorder %s32, 0
      %p263 = por %p261, %p262
      %p264 = scmp.ne.s32.totalorder %s252, %s253
      %p265 = scmp.eq.s32.totalorder %s33, 1
      %p266 = por %p264, %p265
      %p268 = scmp.ne.s32.totalorder %s253, %s267
      %p269 = scmp.eq.s32.totalorder %s33, 0
      %p270 = por %p268, %p269
      %s272 = sadd.s32 %s271, 1
      %p275 = scmp.eq.s32.totalorder %s27, 1
      %p276 = scmp.ne.s32.totalorder %s271, %s273
      %p277 = scmp.eq.s32.totalorder %s27, 0
      %p278 = por %p276, %p277
      %p279 = scmp.ne.s32.totalorder %s271, %s273
      %p280 = scmp.eq.s32.totalorder %s32, 1
      %p281 = por %p279, %p280
      %p282 = scmp.ne.s32.totalorder %s273, %s274
      %p283 = scmp.eq.s32.totalorder %s32, 0
      %p284 = por %p282, %p283
      %p285 = scmp.ne.s32.totalorder %s273, %s274
      %p286 = scmp.eq.s32.totalorder %s33, 1
      %p287 = por %p285, %p286
      %p289 = scmp.ne.s32.totalorder %s274, %s288
      %p290 = scmp.eq.s32.totalorder %s33, 0
      %p291 = por %p289, %p290
      %s293 = sadd.s32 %s292, 1
      %p296 = scmp.eq.s32.totalorder %s27, 1
      %p297 = scmp.ne.s32.totalorder %s292, %s294
      %p298 = scmp.eq.s32.totalorder %s27, 0
      %p299 = por %p297, %p298
      %p300 = scmp.ne.s32.totalorder %s292, %s294
      %p301 = scmp.eq.s32.totalorder %s32, 1
      %p302 = por %p300, %p301
      %p303 = scmp.ne.s32.totalorder %s294, %s295
      %p304 = scmp.eq.s32.totalorder %s32, 0
      %p305 = por %p303, %p304
      %p306 = scmp.ne.s32.totalorder %s294, %s295
      %p307 = scmp.eq.s32.totalorder %s33, 1
      %p308 = por %p306, %p307
      %p310 = scmp.ne.s32.totalorder %s295, %s309
      %p311 = scmp.eq.s32.totalorder %s33, 0
      %p312 = por %p310, %p311
      %s314 = sadd.s32 %s313, 1
      %p317 = scmp.eq.s32.totalorder %s27, 1
      %p318 = scmp.ne.s32.totalorder %s313, %s315
      %p319 = scmp.eq.s32.totalorder %s27, 0
      %p320 = por %p318, %p319
      %p321 = scmp.ne.s32.totalorder %s313, %s315
      %p322 = scmp.eq.s32.totalorder %s32, 1
      %p323 = por %p321, %p322
      %p324 = scmp.ne.s32.totalorder %s315, %s316
      %p325 = scmp.eq.s32.totalorder %s32, 0
      %p326 = por %p324, %p325
      %p327 = scmp.ne.s32.totalorder %s315, %s316
      %p328 = scmp.eq.s32.totalorder %s33, 1
      %p329 = por %p327, %p328
      %p331 = scmp.ne.s32.totalorder %s316, %s330
      %p332 = scmp.eq.s32.totalorder %s33, 0
      %p333 = por %p331, %p332
      %s334 = ssub.s32 %s27, %s34
      %p335 = scmp.eq.s32.totalorder %s334, 0
      %s337 = sadd.s32 %s336, 1
      %s338 = scalar_select %p335, %s336, %s337
      %p341 = pneg %p335
      %p342 = scmp.eq.s32.totalorder %s27, 1
      %p343 = por %p341, %p342
      %p344 = scmp.ne.s32.totalorder %s336, %s339
      %p345 = scmp.eq.s32.totalorder %s27, 0
      %p346 = por %p344, %p345
      %p347 = scmp.ne.s32.totalorder %s336, %s339
      %p348 = scmp.eq.s32.totalorder %s32, 1
      %p349 = por %p347, %p348
      %p350 = scmp.ne.s32.totalorder %s339, %s340
      %p351 = scmp.eq.s32.totalorder %s32, 0
      %p352 = por %p350, %p351
      %p353 = scmp.ne.s32.totalorder %s339, %s340
      %p354 = scmp.eq.s32.totalorder %s33, 1
      %p355 = por %p353, %p354
      %p357 = scmp.ne.s32.totalorder %s340, %s356
      %p358 = scmp.eq.s32.totalorder %s33, 0
      %p359 = por %p357, %p358
      %p360 = scmp.le.s32.totalorder 1, %s27
      %p361 = scmp.lt.s32.totalorder %s27, 3
      %p362 = pnand %p360, %p361
      %p363 = pneg %p362
      // Predicated region
      $region9: #{tpu_custom_call.1} parent=5 // pred_check
        _
      $region10: #{tpu_custom_call.1} parent=5 // pred_check_branch
        %365 = sbr.rel (%p362) target = $region12
      $region11: #{tpu_custom_call.1} parent=5 // pred_region
        %s366 = ssub.s32 %s27, 1
        // Predicated region
        $region13: #{tpu_custom_call.1} parent=11 // pred_check
          %p367 = pneg %p74
        $region14: #{tpu_custom_call.1} parent=11 // pred_check_branch
          %369 = sbr.rel (%p367) target = $region16
        $region15: #{tpu_custom_call.1} parent=11 // pred_region
          _
        $region16: #{tpu_custom_call.1} parent=11 // pred_fallthru
          _
        // Predicated region
        $region17: #{tpu_custom_call.1} parent=11 // pred_check
          %p370 = pneg %p95
        $region18: #{tpu_custom_call.1} parent=11 // pred_check_branch
          %372 = sbr.rel (%p370) target = $region20
        $region19: #{tpu_custom_call.1} parent=11 // pred_region
          _
        $region20: #{tpu_custom_call.1} parent=11 // pred_fallthru
          _
        // Predicated region
        $region21: #{tpu_custom_call.1} parent=11 // pred_check
          %p373 = pneg %p116
        $region22: #{tpu_custom_call.1} parent=11 // pred_check_branch
          %375 = sbr.rel (%p373) target = $region24
        $region23: #{tpu_custom_call.1} parent=11 // pred_region
          _
        $region24: #{tpu_custom_call.1} parent=11 // pred_fallthru
          _
        // Predicated region
        $region25: #{tpu_custom_call.1} parent=11 // pred_check
          %p376 = pneg %p137
        $region26: #{tpu_custom_call.1} parent=11 // pred_check_branch
          %378 = sbr.rel (%p376) target = $region28
        $region27: #{tpu_custom_call.1} parent=11 // pred_region
          _
        $region28: #{tpu_custom_call.1} parent=11 // pred_fallthru
          _
        // Predicated region
        $region29: #{tpu_custom_call.1} parent=11 // pred_check
          %p379 = pneg %p158
        $region30: #{tpu_custom_call.1} parent=11 // pred_check_branch
          %381 = sbr.rel (%p379) target = $region32
        $region31: #{tpu_custom_call.1} parent=11 // pred_region
          _
        $region32: #{tpu_custom_call.1} parent=11 // pred_fallthru
          _
        // Predicated region
        $region33: #{tpu_custom_call.1} parent=11 // pred_check
          %p382 = pneg %p179
        $region34: #{tpu_custom_call.1} parent=11 // pred_check_branch
          %384 = sbr.rel (%p382) target = $region36
        $region35: #{tpu_custom_call.1} parent=11 // pred_region
          _
        $region36: #{tpu_custom_call.1} parent=11 // pred_fallthru
          _
        // Predicated region
        $region37: #{tpu_custom_call.1} parent=11 // pred_check
          %p385 = pneg %p200
        $region38: #{tpu_custom_call.1} parent=11 // pred_check_branch
          %387 = sbr.rel (%p385) target = $region40
        $region39: #{tpu_custom_call.1} parent=11 // pred_region
          _
        $region40: #{tpu_custom_call.1} parent=11 // pred_fallthru
          _
        // Predicated region
        $region41: #{tpu_custom_call.1} parent=11 // pred_check
          %p388 = pneg %p221
        $region42: #{tpu_custom_call.1} parent=11 // pred_check_branch
          %390 = sbr.rel (%p388) target = $region44
        $region43: #{tpu_custom_call.1} parent=11 // pred_region
          _
        $region44: #{tpu_custom_call.1} parent=11 // pred_fallthru
          _
        // Predicated region
        $region45: #{tpu_custom_call.1} parent=11 // pred_check
          %p391 = pneg %p242
        $region46: #{tpu_custom_call.1} parent=11 // pred_check_branch
          %393 = sbr.rel (%p391) target = $region48
        $region47: #{tpu_custom_call.1} parent=11 // pred_region
          _
        $region48: #{tpu_custom_call.1} parent=11 // pred_fallthru
          _
        // Predicated region
        $region49: #{tpu_custom_call.1} parent=11 // pred_check
          %p394 = pneg %p263
        $region50: #{tpu_custom_call.1} parent=11 // pred_check_branch
          %396 = sbr.rel (%p394) target = $region52
        $region51: #{tpu_custom_call.1} parent=11 // pred_region
          _
        $region52: #{tpu_custom_call.1} parent=11 // pred_fallthru
          _
        // Predicated region
        $region53: #{tpu_custom_call.1} parent=11 // pred_check
          %p397 = pneg %p284
        $region54: #{tpu_custom_call.1} parent=11 // pred_check_branch
          %399 = sbr.rel (%p397) target = $region56
        $region55: #{tpu_custom_call.1} parent=11 // pred_region
          _
        $region56: #{tpu_custom_call.1} parent=11 // pred_fallthru
          _
        // Predicated region
        $region57: #{tpu_custom_call.1} parent=11 // pred_check
          %p400 = pneg %p305
        $region58: #{tpu_custom_call.1} parent=11 // pred_check_branch
          %402 = sbr.rel (%p400) target = $region60
        $region59: #{tpu_custom_call.1} parent=11 // pred_region
          _
        $region60: #{tpu_custom_call.1} parent=11 // pred_fallthru
          _
        // Predicated region
        $region61: #{tpu_custom_call.1} parent=11 // pred_check
          %p403 = pneg %p326
        $region62: #{tpu_custom_call.1} parent=11 // pred_check_branch
          %405 = sbr.rel (%p403) target = $region64
        $region63: #{tpu_custom_call.1} parent=11 // pred_region
          _
        $region64: #{tpu_custom_call.1} parent=11 // pred_fallthru
          _
      $region12: #{tpu_custom_call.1} parent=5 // pred_fallthru
        _
      %p406 = scmp.lt.s32.totalorder %s27, 2
      // Predicated region
      $region65: #{tpu_custom_call.1} parent=5 // pred_check
        %p407 = pneg %p406
      $region66: #{tpu_custom_call.1} parent=5 // pred_check_branch
        %409 = sbr.rel (%p407) target = $region68
      $region67: #{tpu_custom_call.1} parent=5 // pred_region
        // Predicated region
        $region69: #{tpu_custom_call.1} parent=67 // pred_check
          %p410 = pneg %p47
        $region70: #{tpu_custom_call.1} parent=67 // pred_check_branch
          %412 = sbr.rel (%p410) target = $region72
        $region71: #{tpu_custom_call.1} parent=67 // pred_region
          %s413 = sand.u32 %s37, 1
          %s414 = sand.u32 %s37, 1
          %s415 = smul.addr %s414, 48
          %s416 = scalar_lea.vmem [#allocation4], %s415
          %s417 = smul.addr %s27, 8
          %s418 = scalar_lea.vmem %s0, %s417
          // Predicated region
          $region73: #{tpu_custom_call.1} parent=71 // pred_check
            _
          $region74: #{tpu_custom_call.1} parent=71 // pred_check_branch
            %420 = sbr.rel (0) target = $region76
          $region75: #{tpu_custom_call.1} parent=71 // pred_region
            // Predicated region
            $region77: #{tpu_custom_call.1} parent=75 // pred_check
              _
            $region78: #{tpu_custom_call.1} parent=75 // pred_check_branch
              %422 = sbr.rel (0) target = $region80
            $region79: #{tpu_custom_call.1} parent=75 // pred_region
              // Predicated region
              $region92: #{tpu_custom_call.1} parent=79 // pred_check
                _
              $region93: #{tpu_custom_call.1} parent=79 // pred_check_branch
                %447 = sbr.rel (0) target = $region95
              $region94: #{tpu_custom_call.1} parent=79 // pred_region
                loop: start=0, step=1, limit=1
                $region96: #{tpu_custom_call.1} parent=94 // loop_pre_header
                  _
                $region97: #{tpu_custom_call.1} parent=94 // loop_header
                  %s449 = sphi 0, %s453
                  %p450 = scmp.ge.s32.totalorder %s449, 1
                  %s454 = sphi %s418, %s418
                  %s455 = sphi %s416, %s416
                $region98: #{tpu_custom_call.1} parent=94 // loop_header_branch
                  %452 = sbr.rel (%p450) target = $region102
                $region99: #{tpu_custom_call.1} parent=94 // loop_body
                  %v456 = vld [vmem:[%s454] sm:$0xff]
                  %457 = vst [vmem:[%s455] sm:$0xff] %v456
                  %v458 = vld [vmem:[%s454 + $0x10] sm:$0xff]
                  %459 = vst [vmem:[%s455 + $0x8] sm:$0xff] %v458
                  %v460 = vld [vmem:[%s454 + $0x20] sm:$0xff]
                  %461 = vst [vmem:[%s455 + $0x10] sm:$0xff] %v460
                  %v462 = vld [vmem:[%s454 + $0x30] sm:$0xff]
                  %463 = vst [vmem:[%s455 + $0x18] sm:$0xff] %v462
                  %v464 = vld [vmem:[%s454 + $0x40] sm:$0xff]
                  %465 = vst [vmem:[%s455 + $0x20] sm:$0xff] %v464
                  %v466 = vld [vmem:[%s454 + $0x50] sm:$0xff]
                  %467 = vst [vmem:[%s455 + $0x28] sm:$0xff] %v466
                $region100: #{tpu_custom_call.1} parent=94 // loop_footer
                  %s453 = sadd.s32 1, %s449
                $region101: #{tpu_custom_call.1} parent=94 // loop_footer_branch
                  %448 = sbr.rel target = $region97
                $region102: #{tpu_custom_call.1} parent=94 // loop_exit
                  _
              $region95: #{tpu_custom_call.1} parent=79 // pred_fallthru
                _
              // Predicated region
              $region103: #{tpu_custom_call.1} parent=79 // pred_check
                _
              $region104: #{tpu_custom_call.1} parent=79 // pred_check_branch
                %469 = sbr.rel target = $region106
              $region105: #{tpu_custom_call.1} parent=79 // pred_region
                _
              $region106: #{tpu_custom_call.1} parent=79 // pred_fallthru
                _
            $region80: #{tpu_custom_call.1} parent=75 // pred_fallthru
              _
            // Predicated region
            $region81: #{tpu_custom_call.1} parent=75 // pred_check
              _
            $region82: #{tpu_custom_call.1} parent=75 // pred_check_branch
              %424 = sbr.rel target = $region84
            $region83: #{tpu_custom_call.1} parent=75 // pred_region
              loop: start=0, step=1, limit=1
              $region85: #{tpu_custom_call.1} parent=83 // loop_pre_header
                _
              $region86: #{tpu_custom_call.1} parent=83 // loop_header
                %s427 = sphi 0, %s431
                %p428 = scmp.ge.s32.totalorder %s427, 1
                %s432 = sphi %s418, %s418
                %s433 = sphi %s416, %s416
              $region87: #{tpu_custom_call.1} parent=83 // loop_header_branch
                %430 = sbr.rel (%p428) target = $region91
              $region88: #{tpu_custom_call.1} parent=83 // loop_body
                %v434 = vld [vmem:[%s432] sm:$0xff]
                %435 = vst [vmem:[%s433] sm:$0xff] %v434
                %v436 = vld [vmem:[%s432 + $0x10] sm:$0xff]
                %437 = vst [vmem:[%s433 + $0x8] sm:$0xff] %v436
                %v438 = vld [vmem:[%s432 + $0x20] sm:$0xff]
                %439 = vst [vmem:[%s433 + $0x10] sm:$0xff] %v438
                %v440 = vld [vmem:[%s432 + $0x30] sm:$0xff]
                %441 = vst [vmem:[%s433 + $0x18] sm:$0xff] %v440
                %v442 = vld [vmem:[%s432 + $0x40] sm:$0xff]
                %443 = vst [vmem:[%s433 + $0x20] sm:$0xff] %v442
                %v444 = vld [vmem:[%s432 + $0x50] sm:$0xff]
                %445 = vst [vmem:[%s433 + $0x28] sm:$0xff] %v444
              $region89: #{tpu_custom_call.1} parent=83 // loop_footer
                %s431 = sadd.s32 1, %s427
              $region90: #{tpu_custom_call.1} parent=83 // loop_footer_branch
                %426 = sbr.rel target = $region86
              $region91: #{tpu_custom_call.1} parent=83 // loop_exit
                _
            $region84: #{tpu_custom_call.1} parent=75 // pred_fallthru
              _
          $region76: #{tpu_custom_call.1} parent=71 // pred_fallthru
            _
          %470 = vnop
        $region72: #{tpu_custom_call.1} parent=67 // pred_fallthru
          _
      $region68: #{tpu_custom_call.1} parent=5 // pred_fallthru
        _
      %p471 = scmp.le.s32.totalorder 1, %s27
      %p472 = scmp.lt.s32.totalorder %s27, 3
      %p473 = pnand %p471, %p472
      %p474 = pneg %p473
      // Predicated region
      $region107: #{tpu_custom_call.1} parent=5 // pred_check
        _
      $region108: #{tpu_custom_call.1} parent=5 // pred_check_branch
        %476 = sbr.rel (%p473) target = $region110
      $region109: #{tpu_custom_call.1} parent=5 // pred_region
        %s477 = ssub.s32 %s27, 1
        %s478 = sand.u32 %s40, 1
        %s479 = sand.u32 %s40, 1
        %s480 = smul.addr %s479, 48
        %s481 = scalar_lea.vmem [#allocation4], %s480
        // Predicated region
        $region111: #{tpu_custom_call.1} parent=109 // pred_check
          %p482 = pneg %p53
        $region112: #{tpu_custom_call.1} parent=109 // pred_check_branch
          %484 = sbr.rel (%p482) target = $region114
        $region113: #{tpu_custom_call.1} parent=109 // pred_region
          _
        $region114: #{tpu_custom_call.1} parent=109 // pred_fallthru
          _
        %s485 = sand.u32 %s40, 1
        %s486 = sand.u32 %s40, 1
        %s487 = smul.addr %s486, 48
        %s488 = scalar_lea.vmem [#allocation4], %s487
        %p489 = pneg %p53
        %p490 = pneg %p50
        %p491 = pneg %p74
        %p492 = pneg %p71
        %p493 = pneg %p95
        %p494 = pneg %p92
        %p495 = pneg %p116
        %p496 = pneg %p113
        %p497 = pneg %p137
        %p498 = pneg %p134
        %p499 = pneg %p158
        %p500 = pneg %p155
        %p501 = pneg %p179
        %p502 = pneg %p176
        %p503 = pneg %p200
        %p504 = pneg %p197
        %p505 = pneg %p221
        %p506 = pneg %p218
        %p507 = pneg %p242
        %p508 = pneg %p239
        %p509 = pneg %p263
        %p510 = pneg %p260
        %p511 = pneg %p284
        %p512 = pneg %p281
        %p513 = pneg %p305
        %p514 = pneg %p302
        %p515 = pneg %p326
        %p516 = pneg %p323
        %p517 = pneg %p352
        %p518 = pneg %p349
        %s519 = sand.u32 %s339, 1
        %s520 = scalar_lea.sflag [#allocation6], %s519
        %s521 = sand.u32 %s339, 1
        %s522 = scalar_lea.vmem [#allocation5], %s521
        %v523 = vld [vmem:[%s481] sm:$0xff]
        %v524 = vld [vmem:[%s481 + $0x8] sm:$0xff]
        %v525 = vld [vmem:[%s481 + $0x10] sm:$0xff]
        %v526 = vld [vmem:[%s481 + $0x18] sm:$0xff]
        %v527 = vld [vmem:[%s481 + $0x20] sm:$0xff]
        %v528 = vld [vmem:[%s481 + $0x28] sm:$0x1]
        %v529 = vld [vmem:[%s481 + $0x29] sm:$0x1]
        %v530 = vld [vmem:[%s1] sm:$0xff]
        %v531 = vld [vmem:[%s1 + $0x8] sm:$0xff]
        %v532 = vld [vmem:[%s1 + $0x10] sm:$0xff]
        %v533 = vld [vmem:[%s1 + $0x18] sm:$0xff]
        %v534 = vld [vmem:[%s2] sm:$0xff]
        %v535 = vld [vmem:[%s2 + $0x8] sm:$0xff]
        %v536 = vld [vmem:[%s2 + $0x10] sm:$0xff]
        %v537 = vld [vmem:[%s2 + $0x18] sm:$0xff]
        %vm538 = vcmask 64512
        %v540 = vsel %vm538, %v534, 0
        %v543 = vsel %vm538, %v535, 0
        %v546 = vsel %vm538, %v536, 0
        %v549 = vsel %vm538, %v537, 0
        %551 = vmatprep.subr.mxu0 0.0
        %552 = vmatpush1.msra.mxu0 %v527
        %553 = vmatprep.subr.mxu0 0.0
        %554 = vmatpush1.msra.mxu0 0.0
        %555 = vmatprep.subr.mxu0 0.0
        %556 = vmatpush1.msra.mxu0 0.0
        %557 = vmatprep.subr.mxu0 0.0
        %558 = vmatpush1.msra.mxu0 0.0
        %559 = vmatprep.subr.mxu0 0.0
        %560 = vmatpush1.msra.mxu0 0.0
        %561 = vmatprep.subr.mxu0 0.0
        %562 = vmatpush1.msra.mxu0 0.0
        %563 = vmatprep.subr.mxu0 0.0
        %564 = vmatpush1.msra.mxu0 0.0
        %565 = vmatprep.subr.mxu0 0.0
        %566 = vmatpush1.msra.mxu0 0.0
        %567 = vmatprep.subr.mxu0 0.0
        %568 = vmatpush1.msra.mxu0 0.0
        %569 = vmatprep.subr.mxu0 0.0
        %570 = vmatpush1.msra.mxu0 0.0
        %571 = vmatprep.subr.mxu0 0.0
        %572 = vmatpush1.msra.mxu0 0.0
        %573 = vmatprep.subr.mxu0 0.0
        %574 = vmatpush1.msra.mxu0 0.0
        %575 = vmatprep.subr.mxu0 0.0
        %576 = vmatpush1.msra.mxu0 0.0
        %577 = vmatprep.subr.mxu0 0.0
        %578 = vmatpush1.msra.mxu0 0.0
        %579 = vmatprep.subr.mxu0 0.0
        %580 = vmatpush1.msra.mxu0 0.0
        %581 = vmatprep.subr.mxu0 0.0
        %582 = vmatpush1.msra.mxu0 0.0
        %583 = vmatprep.subr.mxu0 0.0
        %584 = vmatpush1.msra.mxu0 0.0
        %585 = vmatprep.subr.mxu0 0.0
        %586 = vmatpush1.msra.mxu0 0.0
        %587 = vmatprep.subr.mxu0 0.0
        %588 = vmatpush1.msra.mxu0 0.0
        %589 = vmatprep.subr.mxu0 0.0
        %590 = vmatpush1.msra.mxu0 0.0
        %591 = vmatprep.subr.mxu0 0.0
        %592 = vmatpush1.msra.mxu0 0.0
        %593 = vmatprep.subr.mxu0 0.0
        %594 = vmatpush1.msra.mxu0 0.0
        %595 = vmatprep.subr.mxu0 0.0
        %596 = vmatpush1.msra.mxu0 0.0
        %597 = vmatprep.subr.mxu0 0.0
        %598 = vmatpush1.msra.mxu0 0.0
        %599 = vmatprep.subr.mxu0 0.0
        %600 = vmatpush1.msra.mxu0 0.0
        %601 = vmatprep.subr.mxu0 0.0
        %602 = vmatpush1.msra.mxu0 0.0
        %603 = vmatprep.subr.mxu0 0.0
        %604 = vmatpush1.msra.mxu0 0.0
        %605 = vmatprep.subr.mxu0 0.0
        %606 = vmatpush1.msra.mxu0 0.0
        %607 = vmatprep.subr.mxu0 0.0
        %608 = vmatpush1.msra.mxu0 0.0
        %609 = vmatprep.subr.mxu0 0.0
        %610 = vmatpush1.msra.mxu0 0.0
        %611 = vmatprep.subr.mxu0 0.0
        %612 = vmatpush1.msra.mxu0 0.0
        %613 = vmatprep.subr.mxu0 0.0
        %614 = vmatpush1.msra.mxu0 0.0
        %615 = vmatprep.mubr.f32.mxu0 0.0
        %616 = vmatmul.mubr.f32.gmra.mrb[0].mxu0 %v540
        %v617 = vpop.f32.mrb[0].mxu0
        %v618 = vadd.f32 0.0, %v617
        %v619 = vpop.f32.mrb[0].mxu0
        %620 = vmatprep.mubr.f32.mxu0 0.0
        %621 = vmatmul.mubr.f32.gmra.mrb[0].mxu0 %v543
        %v622 = vpop.f32.mrb[0].mxu0
        %v623 = vadd.f32 0.0, %v622
        %v624 = vpop.f32.mrb[0].mxu0
        %625 = vmatprep.mubr.f32.mxu0 0.0
        %626 = vmatmul.mubr.f32.gmra.mrb[0].mxu0 %v546
        %v627 = vpop.f32.mrb[0].mxu0
        %v628 = vadd.f32 0.0, %v627
        %v629 = vpop.f32.mrb[0].mxu0
        %630 = vmatprep.mubr.f32.mxu0 0.0
        %631 = vmatmul.mubr.f32.gmra.mrb[0].mxu0 %v549
        %v632 = vpop.f32.mrb[0].mxu0
        %v633 = vadd.f32 0.0, %v632
        %v634 = vpop.f32.mrb[0].mxu0
        %635 = vdwg.mxu0
        %vm636 = vcmask 130048
        %v638 = vsel %vm636, %v530, 0
        %v641 = vsel %vm636, %v531, 0
        %v644 = vsel %vm636, %v532, 0
        %v647 = vsel %vm636, %v533, 0
        %649 = vmatprep.subr.mxu0 0.0
        %650 = vmatpush1.msra.mxu0 %v523
        %651 = vmatprep.subr.mxu0 0.0
        %652 = vmatpush1.msra.mxu0 %v524
        %653 = vmatprep.subr.mxu0 0.0
        %654 = vmatpush1.msra.mxu0 0.0
        %655 = vmatprep.subr.mxu0 0.0
        %656 = vmatpush1.msra.mxu0 0.0
        %657 = vmatprep.subr.mxu0 0.0
        %658 = vmatpush1.msra.mxu0 0.0
        %659 = vmatprep.subr.mxu0 0.0
        %660 = vmatpush1.msra.mxu0 0.0
        %661 = vmatprep.subr.mxu0 0.0
        %662 = vmatpush1.msra.mxu0 0.0
        %663 = vmatprep.subr.mxu0 0.0
        %664 = vmatpush1.msra.mxu0 0.0
        %665 = vmatprep.subr.mxu0 0.0
        %666 = vmatpush1.msra.mxu0 0.0
        %667 = vmatprep.subr.mxu0 0.0
        %668 = vmatpush1.msra.mxu0 0.0
        %669 = vmatprep.subr.mxu0 0.0
        %670 = vmatpush1.msra.mxu0 0.0
        %671 = vmatprep.subr.mxu0 0.0
        %672 = vmatpush1.msra.mxu0 0.0
        %673 = vmatprep.subr.mxu0 0.0
        %674 = vmatpush1.msra.mxu0 0.0
        %675 = vmatprep.subr.mxu0 0.0
        %676 = vmatpush1.msra.mxu0 0.0
        %677 = vmatprep.subr.mxu0 0.0
        %678 = vmatpush1.msra.mxu0 0.0
        %679 = vmatprep.subr.mxu0 0.0
        %680 = vmatpush1.msra.mxu0 0.0
        %681 = vmatprep.subr.mxu0 0.0
        %682 = vmatpush1.msra.mxu0 0.0
        %683 = vmatprep.subr.mxu0 0.0
        %684 = vmatpush1.msra.mxu0 0.0
        %685 = vmatprep.subr.mxu0 0.0
        %686 = vmatpush1.msra.mxu0 0.0
        %687 = vmatprep.subr.mxu0 0.0
        %688 = vmatpush1.msra.mxu0 0.0
        %689 = vmatprep.subr.mxu0 0.0
        %690 = vmatpush1.msra.mxu0 0.0
        %691 = vmatprep.subr.mxu0 0.0
        %692 = vmatpush1.msra.mxu0 0.0
        %693 = vmatprep.subr.mxu0 0.0
        %694 = vmatpush1.msra.mxu0 0.0
        %695 = vmatprep.subr.mxu0 0.0
        %696 = vmatpush1.msra.mxu0 0.0
        %697 = vmatprep.subr.mxu0 0.0
        %698 = vmatpush1.msra.mxu0 0.0
        %699 = vmatprep.subr.mxu0 0.0
        %700 = vmatpush1.msra.mxu0 0.0
        %701 = vmatprep.subr.mxu0 0.0
        %702 = vmatpush1.msra.mxu0 0.0
        %703 = vmatprep.subr.mxu0 0.0
        %704 = vmatpush1.msra.mxu0 0.0
        %705 = vmatprep.subr.mxu0 0.0
        %706 = vmatpush1.msra.mxu0 0.0
        %707 = vmatprep.subr.mxu0 0.0
        %708 = vmatpush1.msra.mxu0 0.0
        %709 = vmatprep.subr.mxu0 0.0
        %710 = vmatpush1.msra.mxu0 0.0
        %711 = vmatprep.subr.mxu0 0.0
        %712 = vmatpush1.msra.mxu0 0.0
        %713 = vmatprep.mubr.f32.mxu0 0.0
        %714 = vmatmul.mubr.f32.gmra.mrb[0].mxu0 %v638
        %v715 = vpop.f32.mrb[0].mxu0
        %v716 = vadd.f32 %v618, %v715
        %v717 = vpop.f32.mrb[0].mxu0
        %718 = vmatprep.mubr.f32.mxu0 0.0
        %719 = vmatmul.mubr.f32.gmra.mrb[0].mxu0 %v641
        %v720 = vpop.f32.mrb[0].mxu0
        %v721 = vadd.f32 %v623, %v720
        %v722 = vpop.f32.mrb[0].mxu0
        %723 = vmatprep.mubr.f32.mxu0 0.0
        %724 = vmatmul.mubr.f32.gmra.mrb[0].mxu0 %v644
        %v725 = vpop.f32.mrb[0].mxu0
        %v726 = vadd.f32 %v628, %v725
        %v727 = vpop.f32.mrb[0].mxu0
        %728 = vmatprep.mubr.f32.mxu0 0.0
        %729 = vmatmul.mubr.f32.gmra.mrb[0].mxu0 %v647
        %v730 = vpop.f32.mrb[0].mxu0
        %v731 = vadd.f32 %v633, %v730
        %v732 = vpop.f32.mrb[0].mxu0
        %733 = vdwg.mxu0
        %v734 = vld [vmem:[%s3] sm:$0xff]
        %v735 = vld [vmem:[%s3 + $0x8] sm:$0xff]
        %v736 = vld [vmem:[%s3 + $0x10] sm:$0xff]
        %v737 = vld [vmem:[%s3 + $0x18] sm:$0xff]
        %739 = vset.pattern.permute.xlu0 0
        %740 = vperm.xlu0 %739, %v734
        %v741 = vpop.permute.xlu0 %740
        %744 = vset.pattern.permute.xlu0 0
        %745 = vperm.xlu0 %744, %v735
        %v746 = vpop.permute.xlu0 %745
        %749 = vset.pattern.permute.xlu0 0
        %750 = vperm.xlu0 %749, %v736
        %v751 = vpop.permute.xlu0 %750
        %754 = vset.pattern.permute.xlu0 0
        %755 = vperm.xlu0 %754, %v737
        %v756 = vpop.permute.xlu0 %755
        %v758 = vadd.f32 %v716, %v741
        %v759 = vadd.f32 %v721, %v746
        %v760 = vadd.f32 %v726, %v751
        %v761 = vadd.f32 %v731, %v756
        %v762 = vmax.f32 %v758, 0.0
        %v763 = vmax.f32 %v759, 0.0
        %v764 = vmax.f32 %v760, 0.0
        %v765 = vmax.f32 %v761, 0.0
        %v766 = vld [vmem:[%s4] sm:$0xff]
        %v767 = vld [vmem:[%s4 + $0x8] sm:$0xff]
        %v768 = vld [vmem:[%s4 + $0x10] sm:$0xff]
        %v769 = vld [vmem:[%s4 + $0x18] sm:$0xff]
        %v770 = vld [vmem:[%s5] sm:$0xff]
        %v771 = vld [vmem:[%s5 + $0x8] sm:$0xff]
        %v772 = vld [vmem:[%s5 + $0x10] sm:$0xff]
        %v773 = vld [vmem:[%s5 + $0x18] sm:$0xff]
        %775 = vset.pattern.permute.xlu0 0
        %776 = vperm.xlu0 %775, %v770
        %v777 = vpop.permute.xlu0 %776
        %780 = vset.pattern.permute.xlu0 0
        %781 = vperm.xlu0 %780, %v771
        %v782 = vpop.permute.xlu0 %781
        %785 = vset.pattern.permute.xlu0 0
        %786 = vperm.xlu0 %785, %v772
        %v787 = vpop.permute.xlu0 %786
        %790 = vset.pattern.permute.xlu0 0
        %791 = vperm.xlu0 %790, %v773
        %v792 = vpop.permute.xlu0 %791
        %vm794 = vcmask 261120
        %v796 = vsel %vm794, %v766, 0
        %v799 = vsel %vm794, %v767, 0
        %v802 = vsel %vm794, %v768, 0
        %v805 = vsel %vm794, %v769, 0
        %807 = vmatprep.subr.mxu0 0.0
        %808 = vmatpush1.msra.mxu0 %v762
        %809 = vmatprep.subr.mxu0 0.0
        %810 = vmatpush1.msra.mxu0 %v763
        %811 = vmatprep.subr.mxu0 0.0
        %812 = vmatpush1.msra.mxu0 %v764
        %813 = vmatprep.subr.mxu0 0.0
        %814 = vmatpush1.msra.mxu0 %v765
        %815 = vmatprep.subr.mxu0 0.0
        %816 = vmatpush1.msra.mxu0 0.0
        %817 = vmatprep.subr.mxu0 0.0
        %818 = vmatpush1.msra.mxu0 0.0
        %819 = vmatprep.subr.mxu0 0.0
        %820 = vmatpush1.msra.mxu0 0.0
        %821 = vmatprep.subr.mxu0 0.0
        %822 = vmatpush1.msra.mxu0 0.0
        %823 = vmatprep.subr.mxu0 0.0
        %824 = vmatpush1.msra.mxu0 0.0
        %825 = vmatprep.subr.mxu0 0.0
        %826 = vmatpush1.msra.mxu0 0.0
        %827 = vmatprep.subr.mxu0 0.0
        %828 = vmatpush1.msra.mxu0 0.0
        %829 = vmatprep.subr.mxu0 0.0
        %830 = vmatpush1.msra.mxu0 0.0
        %831 = vmatprep.subr.mxu0 0.0
        %832 = vmatpush1.msra.mxu0 0.0
        %833 = vmatprep.subr.mxu0 0.0
        %834 = vmatpush1.msra.mxu0 0.0
        %835 = vmatprep.subr.mxu0 0.0
        %836 = vmatpush1.msra.mxu0 0.0
        %837 = vmatprep.subr.mxu0 0.0
        %838 = vmatpush1.msra.mxu0 0.0
        %839 = vmatprep.subr.mxu0 0.0
        %840 = vmatpush1.msra.mxu0 0.0
        %841 = vmatprep.subr.mxu0 0.0
        %842 = vmatpush1.msra.mxu0 0.0
        %843 = vmatprep.subr.mxu0 0.0
        %844 = vmatpush1.msra.mxu0 0.0
        %845 = vmatprep.subr.mxu0 0.0
        %846 = vmatpush1.msra.mxu0 0.0
        %847 = vmatprep.subr.mxu0 0.0
        %848 = vmatpush1.msra.mxu0 0.0
        %849 = vmatprep.subr.mxu0 0.0
        %850 = vmatpush1.msra.mxu0 0.0
        %851 = vmatprep.subr.mxu0 0.0
        %852 = vmatpush1.msra.mxu0 0.0
        %853 = vmatprep.subr.mxu0 0.0
        %854 = vmatpush1.msra.mxu0 0.0
        %855 = vmatprep.subr.mxu0 0.0
        %856 = vmatpush1.msra.mxu0 0.0
        %857 = vmatprep.subr.mxu0 0.0
        %858 = vmatpush1.msra.mxu0 0.0
        %859 = vmatprep.subr.mxu0 0.0
        %860 = vmatpush1.msra.mxu0 0.0
        %861 = vmatprep.subr.mxu0 0.0
        %862 = vmatpush1.msra.mxu0 0.0
        %863 = vmatprep.subr.mxu0 0.0
        %864 = vmatpush1.msra.mxu0 0.0
        %865 = vmatprep.subr.mxu0 0.0
        %866 = vmatpush1.msra.mxu0 0.0
        %867 = vmatprep.subr.mxu0 0.0
        %868 = vmatpush1.msra.mxu0 0.0
        %869 = vmatprep.subr.mxu0 0.0
        %870 = vmatpush1.msra.mxu0 0.0
        %871 = vmatprep.mubr.f32.mxu0 0.0
        %872 = vmatmul.mubr.f32.gmra.mrb[0].mxu0 %v796
        %v873 = vpop.f32.mrb[0].mxu0
        %v874 = vadd.f32 %v777, %v873
        %v875 = vpop.f32.mrb[0].mxu0
        %876 = vmatprep.mubr.f32.mxu0 0.0
        %877 = vmatmul.mubr.f32.gmra.mrb[0].mxu0 %v799
        %v878 = vpop.f32.mrb[0].mxu0
        %v879 = vadd.f32 %v782, %v878
        %v880 = vpop.f32.mrb[0].mxu0
        %881 = vmatprep.mubr.f32.mxu0 0.0
        %882 = vmatmul.mubr.f32.gmra.mrb[0].mxu0 %v802
        %v883 = vpop.f32.mrb[0].mxu0
        %v884 = vadd.f32 %v787, %v883
        %v885 = vpop.f32.mrb[0].mxu0
        %886 = vmatprep.mubr.f32.mxu0 0.0
        %887 = vmatmul.mubr.f32.gmra.mrb[0].mxu0 %v805
        %v888 = vpop.f32.mrb[0].mxu0
        %v889 = vadd.f32 %v792, %v888
        %v890 = vpop.f32.mrb[0].mxu0
        %891 = vdwg.mxu0
        %v892 = vmax.f32 %v874, 0.0
        %v893 = vmax.f32 %v879, 0.0
        %v894 = vmax.f32 %v884, 0.0
        %v895 = vmax.f32 %v889, 0.0
        %v896 = vld [vmem:[%s6] sm:$0x1]
        %v897 = vld [vmem:[#allocation2] sm:$0x1]
        %899 = vset.pattern.permute.xlu0 0
        %900 = vperm.xlu0 %899, %v897
        %v901 = vpop.permute.xlu0 %900
        %v903 = vlaneseq
        %v904 = vshrl.u32 %v903, 7
        %v905 = vsub.s32 0, %v904
        %v906 = vrot.slane %v901, %v905
        %v908 = vsel %vm794, %v896, 0
        %910 = vmatprep.subr.mxu0 0.0
        %911 = vmatpush1.msra.mxu0 %v892
        %912 = vmatprep.subr.mxu0 0.0
        %913 = vmatpush1.msra.mxu0 %v893
        %914 = vmatprep.subr.mxu0 0.0
        %915 = vmatpush1.msra.mxu0 %v894
        %916 = vmatprep.subr.mxu0 0.0
        %917 = vmatpush1.msra.mxu0 %v895
        %918 = vmatprep.subr.mxu0 0.0
        %919 = vmatpush1.msra.mxu0 0.0
        %920 = vmatprep.subr.mxu0 0.0
        %921 = vmatpush1.msra.mxu0 0.0
        %922 = vmatprep.subr.mxu0 0.0
        %923 = vmatpush1.msra.mxu0 0.0
        %924 = vmatprep.subr.mxu0 0.0
        %925 = vmatpush1.msra.mxu0 0.0
        %926 = vmatprep.subr.mxu0 0.0
        %927 = vmatpush1.msra.mxu0 0.0
        %928 = vmatprep.subr.mxu0 0.0
        %929 = vmatpush1.msra.mxu0 0.0
        %930 = vmatprep.subr.mxu0 0.0
        %931 = vmatpush1.msra.mxu0 0.0
        %932 = vmatprep.subr.mxu0 0.0
        %933 = vmatpush1.msra.mxu0 0.0
        %934 = vmatprep.subr.mxu0 0.0
        %935 = vmatpush1.msra.mxu0 0.0
        %936 = vmatprep.subr.mxu0 0.0
        %937 = vmatpush1.msra.mxu0 0.0
        %938 = vmatprep.subr.mxu0 0.0
        %939 = vmatpush1.msra.mxu0 0.0
        %940 = vmatprep.subr.mxu0 0.0
        %941 = vmatpush1.msra.mxu0 0.0
        %942 = vmatprep.subr.mxu0 0.0
        %943 = vmatpush1.msra.mxu0 0.0
        %944 = vmatprep.subr.mxu0 0.0
        %945 = vmatpush1.msra.mxu0 0.0
        %946 = vmatprep.subr.mxu0 0.0
        %947 = vmatpush1.msra.mxu0 0.0
        %948 = vmatprep.subr.mxu0 0.0
        %949 = vmatpush1.msra.mxu0 0.0
        %950 = vmatprep.subr.mxu0 0.0
        %951 = vmatpush1.msra.mxu0 0.0
        %952 = vmatprep.subr.mxu0 0.0
        %953 = vmatpush1.msra.mxu0 0.0
        %954 = vmatprep.subr.mxu0 0.0
        %955 = vmatpush1.msra.mxu0 0.0
        %956 = vmatprep.subr.mxu0 0.0
        %957 = vmatpush1.msra.mxu0 0.0
        %958 = vmatprep.subr.mxu0 0.0
        %959 = vmatpush1.msra.mxu0 0.0
        %960 = vmatprep.subr.mxu0 0.0
        %961 = vmatpush1.msra.mxu0 0.0
        %962 = vmatprep.subr.mxu0 0.0
        %963 = vmatpush1.msra.mxu0 0.0
        %964 = vmatprep.subr.mxu0 0.0
        %965 = vmatpush1.msra.mxu0 0.0
        %966 = vmatprep.subr.mxu0 0.0
        %967 = vmatpush1.msra.mxu0 0.0
        %968 = vmatprep.subr.mxu0 0.0
        %969 = vmatpush1.msra.mxu0 0.0
        %970 = vmatprep.subr.mxu0 0.0
        %971 = vmatpush1.msra.mxu0 0.0
        %972 = vmatprep.subr.mxu0 0.0
        %973 = vmatpush1.msra.mxu0 0.0
        %974 = vmatprep.mubr.f32.mxu0 0.0
        %975 = vmatmul.mubr.f32.gmra.mrb[0].mxu0 %v908
        %v976 = vpop.f32.mrb[0].mxu0
        %v977 = vadd.f32 %v906, %v976
        %v978 = vpop.f32.mrb[0].mxu0
        %979 = vdwg.mxu0
        %v980 = vld [vmem:[%s8] sm:$0xff]
        %v981 = vld [vmem:[%s8 + $0x8] sm:$0xff]
        %v982 = vld [vmem:[%s8 + $0x10] sm:$0xff]
        %v983 = vld [vmem:[%s8 + $0x18] sm:$0xff]
        %v984 = vld [vmem:[%s9] sm:$0xff]
        %v985 = vld [vmem:[%s9 + $0x8] sm:$0xff]
        %v986 = vld [vmem:[%s9 + $0x10] sm:$0xff]
        %v987 = vld [vmem:[%s9 + $0x18] sm:$0xff]
        %989 = vset.pattern.permute.xlu0 0
        %990 = vperm.xlu0 %989, %v984
        %v991 = vpop.permute.xlu0 %990
        %994 = vset.pattern.permute.xlu0 0
        %995 = vperm.xlu0 %994, %v985
        %v996 = vpop.permute.xlu0 %995
        %999 = vset.pattern.permute.xlu0 0
        %1000 = vperm.xlu0 %999, %v986
        %v1001 = vpop.permute.xlu0 %1000
        %1004 = vset.pattern.permute.xlu0 0
        %1005 = vperm.xlu0 %1004, %v987
        %v1006 = vpop.permute.xlu0 %1005
        %v1009 = vsel %vm636, %v980, 0
        %v1012 = vsel %vm636, %v981, 0
        %v1015 = vsel %vm636, %v982, 0
        %v1018 = vsel %vm636, %v983, 0
        %1020 = vmatprep.subr.mxu0 %v525
        %1021 = vmatpush1.msra.mxu0 %v523
        %1022 = vmatprep.subr.mxu0 %v526
        %1023 = vmatpush1.msra.mxu0 %v524
        %1024 = vmatprep.subr.mxu0 0.0
        %1025 = vmatpush1.msra.mxu0 0.0
        %1026 = vmatprep.subr.mxu0 0.0
        %1027 = vmatpush1.msra.mxu0 0.0
        %1028 = vmatprep.subr.mxu0 0.0
        %1029 = vmatpush1.msra.mxu0 0.0
        %1030 = vmatprep.subr.mxu0 0.0
        %1031 = vmatpush1.msra.mxu0 0.0
        %1032 = vmatprep.subr.mxu0 0.0
        %1033 = vmatpush1.msra.mxu0 0.0
        %1034 = vmatprep.subr.mxu0 0.0
        %1035 = vmatpush1.msra.mxu0 0.0
        %1036 = vmatprep.subr.mxu0 0.0
        %1037 = vmatpush1.msra.mxu0 0.0
        %1038 = vmatprep.subr.mxu0 0.0
        %1039 = vmatpush1.msra.mxu0 0.0
        %1040 = vmatprep.subr.mxu0 0.0
        %1041 = vmatpush1.msra.mxu0 0.0
        %1042 = vmatprep.subr.mxu0 0.0
        %1043 = vmatpush1.msra.mxu0 0.0
        %1044 = vmatprep.subr.mxu0 0.0
        %1045 = vmatpush1.msra.mxu0 0.0
        %1046 = vmatprep.subr.mxu0 0.0
        %1047 = vmatpush1.msra.mxu0 0.0
        %1048 = vmatprep.subr.mxu0 0.0
        %1049 = vmatpush1.msra.mxu0 0.0
        %1050 = vmatprep.subr.mxu0 0.0
        %1051 = vmatpush1.msra.mxu0 0.0
        %1052 = vmatprep.subr.mxu0 0.0
        %1053 = vmatpush1.msra.mxu0 0.0
        %1054 = vmatprep.subr.mxu0 0.0
        %1055 = vmatpush1.msra.mxu0 0.0
        %1056 = vmatprep.subr.mxu0 0.0
        %1057 = vmatpush1.msra.mxu0 0.0
        %1058 = vmatprep.subr.mxu0 0.0
        %1059 = vmatpush1.msra.mxu0 0.0
        %1060 = vmatprep.subr.mxu0 0.0
        %1061 = vmatpush1.msra.mxu0 0.0
        %1062 = vmatprep.subr.mxu0 0.0
        %1063 = vmatpush1.msra.mxu0 0.0
        %1064 = vmatprep.subr.mxu0 0.0
        %1065 = vmatpush1.msra.mxu0 0.0
        %1066 = vmatprep.subr.mxu0 0.0
        %1067 = vmatpush1.msra.mxu0 0.0
        %1068 = vmatprep.subr.mxu0 0.0
        %1069 = vmatpush1.msra.mxu0 0.0
        %1070 = vmatprep.subr.mxu0 0.0
        %1071 = vmatpush1.msra.mxu0 0.0
        %1072 = vmatprep.subr.mxu0 0.0
        %1073 = vmatpush1.msra.mxu0 0.0
        %1074 = vmatprep.subr.mxu0 0.0
        %1075 = vmatpush1.msra.mxu0 0.0
        %1076 = vmatprep.subr.mxu0 0.0
        %1077 = vmatpush1.msra.mxu0 0.0
        %1078 = vmatprep.subr.mxu0 0.0
        %1079 = vmatpush1.msra.mxu0 0.0
        %1080 = vmatprep.subr.mxu0 0.0
        %1081 = vmatpush1.msra.mxu0 0.0
        %1082 = vmatprep.subr.mxu0 0.0
        %1083 = vmatpush1.msra.mxu0 0.0
        %1084 = vmatprep.mubr.f32.mxu0 0.0
        %1085 = vmatmul.mubr.f32.gmra.mrb[0].mxu0 %v1009
        %v1086 = vpop.f32.mrb[0].mxu0
        %v1087 = vadd.f32 %v991, %v1086
        %v1088 = vpop.f32.mrb[0].mxu0
        %v1089 = vadd.f32 %v991, %v1088
        %1090 = vmatprep.mubr.f32.mxu0 0.0
        %1091 = vmatmul.mubr.f32.gmra.mrb[0].mxu0 %v1012
        %v1092 = vpop.f32.mrb[0].mxu0
        %v1093 = vadd.f32 %v996, %v1092
        %v1094 = vpop.f32.mrb[0].mxu0
        %v1095 = vadd.f32 %v996, %v1094
        %1096 = vmatprep.mubr.f32.mxu0 0.0
        %1097 = vmatmul.mubr.f32.gmra.mrb[0].mxu0 %v1015
        %v1098 = vpop.f32.mrb[0].mxu0
        %v1099 = vadd.f32 %v1001, %v1098
        %v1100 = vpop.f32.mrb[0].mxu0
        %v1101 = vadd.f32 %v1001, %v1100
        %1102 = vmatprep.mubr.f32.mxu0 0.0
        %1103 = vmatmul.mubr.f32.gmra.mrb[0].mxu0 %v1018
        %v1104 = vpop.f32.mrb[0].mxu0
        %v1105 = vadd.f32 %v1006, %v1104
        %v1106 = vpop.f32.mrb[0].mxu0
        %v1107 = vadd.f32 %v1006, %v1106
        %1108 = vdwg.mxu0
        %v1109 = vmax.f32 %v1087, 0.0
        %v1110 = vmax.f32 %v1089, 0.0
        %v1111 = vmax.f32 %v1093, 0.0
        %v1112 = vmax.f32 %v1095, 0.0
        %v1113 = vmax.f32 %v1099, 0.0
        %v1114 = vmax.f32 %v1101, 0.0
        %v1115 = vmax.f32 %v1105, 0.0
        %v1116 = vmax.f32 %v1107, 0.0
        %v1117 = vld [vmem:[%s10] sm:$0xff]
        %v1118 = vld [vmem:[%s10 + $0x8] sm:$0xff]
        %v1119 = vld [vmem:[%s10 + $0x10] sm:$0xff]
        %v1120 = vld [vmem:[%s10 + $0x18] sm:$0xff]
        %v1121 = vld [vmem:[%s11] sm:$0xff]
        %v1122 = vld [vmem:[%s11 + $0x8] sm:$0xff]
        %v1123 = vld [vmem:[%s11 + $0x10] sm:$0xff]
        %v1124 = vld [vmem:[%s11 + $0x18] sm:$0xff]
        %1126 = vset.pattern.permute.xlu0 0
        %1127 = vperm.xlu0 %1126, %v1121
        %v1128 = vpop.permute.xlu0 %1127
        %1131 = vset.pattern.permute.xlu0 0
        %1132 = vperm.xlu0 %1131, %v1122
        %v1133 = vpop.permute.xlu0 %1132
        %1136 = vset.pattern.permute.xlu0 0
        %1137 = vperm.xlu0 %1136, %v1123
        %v1138 = vpop.permute.xlu0 %1137
        %1141 = vset.pattern.permute.xlu0 0
        %1142 = vperm.xlu0 %1141, %v1124
        %v1143 = vpop.permute.xlu0 %1142
        %v1146 = vsel %vm794, %v1117, 0
        %v1149 = vsel %vm794, %v1118, 0
        %v1152 = vsel %vm794, %v1119, 0
        %v1155 = vsel %vm794, %v1120, 0
        %1157 = vmatprep.subr.mxu0 %v1110
        %1158 = vmatpush1.msra.mxu0 %v1109
        %1159 = vmatprep.subr.mxu0 %v1112
        %1160 = vmatpush1.msra.mxu0 %v1111
        %1161 = vmatprep.subr.mxu0 %v1114
        %1162 = vmatpush1.msra.mxu0 %v1113
        %1163 = vmatprep.subr.mxu0 %v1116
        %1164 = vmatpush1.msra.mxu0 %v1115
        %1165 = vmatprep.subr.mxu0 0.0
        %1166 = vmatpush1.msra.mxu0 0.0
        %1167 = vmatprep.subr.mxu0 0.0
        %1168 = vmatpush1.msra.mxu0 0.0
        %1169 = vmatprep.subr.mxu0 0.0
        %1170 = vmatpush1.msra.mxu0 0.0
        %1171 = vmatprep.subr.mxu0 0.0
        %1172 = vmatpush1.msra.mxu0 0.0
        %1173 = vmatprep.subr.mxu0 0.0
        %1174 = vmatpush1.msra.mxu0 0.0
        %1175 = vmatprep.subr.mxu0 0.0
        %1176 = vmatpush1.msra.mxu0 0.0
        %1177 = vmatprep.subr.mxu0 0.0
        %1178 = vmatpush1.msra.mxu0 0.0
        %1179 = vmatprep.subr.mxu0 0.0
        %1180 = vmatpush1.msra.mxu0 0.0
        %1181 = vmatprep.subr.mxu0 0.0
        %1182 = vmatpush1.msra.mxu0 0.0
        %1183 = vmatprep.subr.mxu0 0.0
        %1184 = vmatpush1.msra.mxu0 0.0
        %1185 = vmatprep.subr.mxu0 0.0
        %1186 = vmatpush1.msra.mxu0 0.0
        %1187 = vmatprep.subr.mxu0 0.0
        %1188 = vmatpush1.msra.mxu0 0.0
        %1189 = vmatprep.subr.mxu0 0.0
        %1190 = vmatpush1.msra.mxu0 0.0
        %1191 = vmatprep.subr.mxu0 0.0
        %1192 = vmatpush1.msra.mxu0 0.0
        %1193 = vmatprep.subr.mxu0 0.0
        %1194 = vmatpush1.msra.mxu0 0.0
        %1195 = vmatprep.subr.mxu0 0.0
        %1196 = vmatpush1.msra.mxu0 0.0
        %1197 = vmatprep.subr.mxu0 0.0
        %1198 = vmatpush1.msra.mxu0 0.0
        %1199 = vmatprep.subr.mxu0 0.0
        %1200 = vmatpush1.msra.mxu0 0.0
        %1201 = vmatprep.subr.mxu0 0.0
        %1202 = vmatpush1.msra.mxu0 0.0
        %1203 = vmatprep.subr.mxu0 0.0
        %1204 = vmatpush1.msra.mxu0 0.0
        %1205 = vmatprep.subr.mxu0 0.0
        %1206 = vmatpush1.msra.mxu0 0.0
        %1207 = vmatprep.subr.mxu0 0.0
        %1208 = vmatpush1.msra.mxu0 0.0
        %1209 = vmatprep.subr.mxu0 0.0
        %1210 = vmatpush1.msra.mxu0 0.0
        %1211 = vmatprep.subr.mxu0 0.0
        %1212 = vmatpush1.msra.mxu0 0.0
        %1213 = vmatprep.subr.mxu0 0.0
        %1214 = vmatpush1.msra.mxu0 0.0
        %1215 = vmatprep.subr.mxu0 0.0
        %1216 = vmatpush1.msra.mxu0 0.0
        %1217 = vmatprep.subr.mxu0 0.0
        %1218 = vmatpush1.msra.mxu0 0.0
        %1219 = vmatprep.subr.mxu0 0.0
        %1220 = vmatpush1.msra.mxu0 0.0
        %1221 = vmatprep.mubr.f32.mxu0 0.0
        %1222 = vmatmul.mubr.f32.gmra.mrb[0].mxu0 %v1146
        %v1223 = vpop.f32.mrb[0].mxu0
        %v1224 = vadd.f32 %v1128, %v1223
        %v1225 = vpop.f32.mrb[0].mxu0
        %v1226 = vadd.f32 %v1128, %v1225
        %1227 = vmatprep.mubr.f32.mxu0 0.0
        %1228 = vmatmul.mubr.f32.gmra.mrb[0].mxu0 %v1149
        %v1229 = vpop.f32.mrb[0].mxu0
        %v1230 = vadd.f32 %v1133, %v1229
        %v1231 = vpop.f32.mrb[0].mxu0
        %v1232 = vadd.f32 %v1133, %v1231
        %1233 = vmatprep.mubr.f32.mxu0 0.0
        %1234 = vmatmul.mubr.f32.gmra.mrb[0].mxu0 %v1152
        %v1235 = vpop.f32.mrb[0].mxu0
        %v1236 = vadd.f32 %v1138, %v1235
        %v1237 = vpop.f32.mrb[0].mxu0
        %v1238 = vadd.f32 %v1138, %v1237
        %1239 = vmatprep.mubr.f32.mxu0 0.0
        %1240 = vmatmul.mubr.f32.gmra.mrb[0].mxu0 %v1155
        %v1241 = vpop.f32.mrb[0].mxu0
        %v1242 = vadd.f32 %v1143, %v1241
        %v1243 = vpop.f32.mrb[0].mxu0
        %v1244 = vadd.f32 %v1143, %v1243
        %1245 = vdwg.mxu0
        %v1246 = vmax.f32 %v1224, 0.0
        %v1247 = vmax.f32 %v1226, 0.0
        %v1248 = vmax.f32 %v1230, 0.0
        %v1249 = vmax.f32 %v1232, 0.0
        %v1250 = vmax.f32 %v1236, 0.0
        %v1251 = vmax.f32 %v1238, 0.0
        %v1252 = vmax.f32 %v1242, 0.0
        %v1253 = vmax.f32 %v1244, 0.0
        %v1254 = vld [vmem:[%s12] sm:$0x1]
        %v1255 = vld [vmem:[#allocation3] sm:$0x1]
        %1257 = vset.pattern.permute.xlu0 0
        %1258 = vperm.xlu0 %1257, %v1255
        %v1259 = vpop.permute.xlu0 %1258
        %v1261 = vlaneseq
        %v1262 = vshrl.u32 %v1261, 7
        %v1263 = vsub.s32 0, %v1262
        %v1264 = vrot.slane %v1259, %v1263
        %v1266 = vsel %vm794, %v1254, 0
        %1268 = vmatprep.subr.mxu0 %v1247
        %1269 = vmatpush1.msra.mxu0 %v1246
        %1270 = vmatprep.subr.mxu0 %v1249
        %1271 = vmatpush1.msra.mxu0 %v1248
        %1272 = vmatprep.subr.mxu0 %v1251
        %1273 = vmatpush1.msra.mxu0 %v1250
        %1274 = vmatprep.subr.mxu0 %v1253
        %1275 = vmatpush1.msra.mxu0 %v1252
        %1276 = vmatprep.subr.mxu0 0.0
        %1277 = vmatpush1.msra.mxu0 0.0
        %1278 = vmatprep.subr.mxu0 0.0
        %1279 = vmatpush1.msra.mxu0 0.0
        %1280 = vmatprep.subr.mxu0 0.0
        %1281 = vmatpush1.msra.mxu0 0.0
        %1282 = vmatprep.subr.mxu0 0.0
        %1283 = vmatpush1.msra.mxu0 0.0
        %1284 = vmatprep.subr.mxu0 0.0
        %1285 = vmatpush1.msra.mxu0 0.0
        %1286 = vmatprep.subr.mxu0 0.0
        %1287 = vmatpush1.msra.mxu0 0.0
        %1288 = vmatprep.subr.mxu0 0.0
        %1289 = vmatpush1.msra.mxu0 0.0
        %1290 = vmatprep.subr.mxu0 0.0
        %1291 = vmatpush1.msra.mxu0 0.0
        %1292 = vmatprep.subr.mxu0 0.0
        %1293 = vmatpush1.msra.mxu0 0.0
        %1294 = vmatprep.subr.mxu0 0.0
        %1295 = vmatpush1.msra.mxu0 0.0
        %1296 = vmatprep.subr.mxu0 0.0
        %1297 = vmatpush1.msra.mxu0 0.0
        %1298 = vmatprep.subr.mxu0 0.0
        %1299 = vmatpush1.msra.mxu0 0.0
        %1300 = vmatprep.subr.mxu0 0.0
        %1301 = vmatpush1.msra.mxu0 0.0
        %1302 = vmatprep.subr.mxu0 0.0
        %1303 = vmatpush1.msra.mxu0 0.0
        %1304 = vmatprep.subr.mxu0 0.0
        %1305 = vmatpush1.msra.mxu0 0.0
        %1306 = vmatprep.subr.mxu0 0.0
        %1307 = vmatpush1.msra.mxu0 0.0
        %1308 = vmatprep.subr.mxu0 0.0
        %1309 = vmatpush1.msra.mxu0 0.0
        %1310 = vmatprep.subr.mxu0 0.0
        %1311 = vmatpush1.msra.mxu0 0.0
        %1312 = vmatprep.subr.mxu0 0.0
        %1313 = vmatpush1.msra.mxu0 0.0
        %1314 = vmatprep.subr.mxu0 0.0
        %1315 = vmatpush1.msra.mxu0 0.0
        %1316 = vmatprep.subr.mxu0 0.0
        %1317 = vmatpush1.msra.mxu0 0.0
        %1318 = vmatprep.subr.mxu0 0.0
        %1319 = vmatpush1.msra.mxu0 0.0
        %1320 = vmatprep.subr.mxu0 0.0
        %1321 = vmatpush1.msra.mxu0 0.0
        %1322 = vmatprep.subr.mxu0 0.0
        %1323 = vmatpush1.msra.mxu0 0.0
        %1324 = vmatprep.subr.mxu0 0.0
        %1325 = vmatpush1.msra.mxu0 0.0
        %1326 = vmatprep.subr.mxu0 0.0
        %1327 = vmatpush1.msra.mxu0 0.0
        %1328 = vmatprep.subr.mxu0 0.0
        %1329 = vmatpush1.msra.mxu0 0.0
        %1330 = vmatprep.subr.mxu0 0.0
        %1331 = vmatpush1.msra.mxu0 0.0
        %1332 = vmatprep.mubr.f32.mxu0 0.0
        %1333 = vmatmul.mubr.f32.gmra.mrb[0].mxu0 %v1266
        %v1334 = vpop.f32.mrb[0].mxu0
        %v1335 = vadd.f32 %v1264, %v1334
        %v1336 = vpop.f32.mrb[0].mxu0
        %v1337 = vadd.f32 %v1264, %v1336
        %1338 = vdwg.mxu0
        %v1339 = vsub.f32 1.0, %v528
        %v1340 = vmul.f32 %v1339, 0.99
        %v1341 = vmul.f32 %v1340, %v1337
        %v1342 = vadd.f32 %v977, %v1341
        %v1343 = vsub.f32 %v1342, %v1335
        %v1344 = vsub.f32 %v1343, %v529
        %1345 = vst [vmem:[%s522] sm:$0x1] %v1344
        %s1346 = sand.u32 %s339, 1
        %s1347 = scalar_lea.sflag [#allocation6], %s1346
        %s1348 = sand.u32 %s339, 1
        %s1349 = scalar_lea.vmem [#allocation5], %s1348
        // Predicated region
        $region115: #{tpu_custom_call.1} parent=109 // pred_check
          %p1350 = pneg %p349
        $region116: #{tpu_custom_call.1} parent=109 // pred_check_branch
          %1352 = sbr.rel (%p1350) target = $region118
        $region117: #{tpu_custom_call.1} parent=109 // pred_region
          %s1354 = ssub.s32 16, 16
          %1355 = vsyncadd %s1347, %s1354
          %s1356 = smul.addr %s32, 16
          %s1357 = scalar_lea.hbm %s14, %s1356
          %s1359 = sshll.u32 %s1349, 4
          %s1360 = int_to_ptr.vmem [resolvable:$true] %s1359
          %1362 = dma.vmem_to_hbm [thread:$0]  %s1360, 16, %s1357, %s1347
        $region118: #{tpu_custom_call.1} parent=109 // pred_fallthru
          _
      $region110: #{tpu_custom_call.1} parent=5 // pred_fallthru
        _
      %p1363 = scmp.le.s32.totalorder 2, %s27
      // Predicated region
      $region119: #{tpu_custom_call.1} parent=5 // pred_check
        %p1364 = pneg %p1363
      $region120: #{tpu_custom_call.1} parent=5 // pred_check_branch
        %1366 = sbr.rel (%p1364) target = $region122
      $region121: #{tpu_custom_call.1} parent=5 // pred_region
        %s1367 = ssub.s32 %s27, 2
        // Predicated region
        $region123: #{tpu_custom_call.1} parent=121 // pred_check
          %p1368 = pneg %p355
        $region124: #{tpu_custom_call.1} parent=121 // pred_check_branch
          %1370 = sbr.rel (%p1368) target = $region126
        $region125: #{tpu_custom_call.1} parent=121 // pred_region
          %s1371 = sand.u32 %s340, 1
          %s1372 = scalar_lea.sflag [#allocation6], %s1371
          %s1373 = sand.u32 %s340, 1
          %s1374 = scalar_lea.vmem [#allocation5], %s1373
          %1375 = dma.done %s1372, 16
        $region126: #{tpu_custom_call.1} parent=121 // pred_fallthru
          _
      $region122: #{tpu_custom_call.1} parent=5 // pred_fallthru
        _
    $region6: #{tpu_custom_call.1} parent=1 // loop_footer
      %s31 = sadd.s32 1, %s27
    $region7: #{tpu_custom_call.1} parent=1 // loop_footer_branch
      %26 = sbr.rel target = $region3
    $region8: #{tpu_custom_call.1} parent=1 // loop_exit
      _
    %1376 = vsyncpa [#allocation6], 1
    %s1377 = scalar_lea.sflag [#allocation6], 1
    %1378 = vsyncpa %s1377, 1

</llo_original>
